<compile_context>
chip_gen: v5e
topology: v5e:2x2
jax: 0.10.0
libtpu: 0.0.40
codegen_flags: <defaults>
</compile_context>

<pallas_src>
import functools
import math

import jax
import jax.numpy as jnp
from jax.experimental import pallas as pl
from jax.experimental.pallas import tpu as pltpu


def _round_up(x, m):
    return ((x + m - 1) // m) * m


def _leaky_relu(x, slope=0.2):
    return jnp.where(x > 0, x, slope * x)


def _vae_kernel(x_ref, eps_ref,
                w1_ref, b1_ref,        # encoder fc1        : (D, 512), (1, 512)
                w23_ref, b23_ref,      # fused fc2 || fc3   : (512, NZP), (1, NZP)
                wd1_ref, bd1_ref,      # decoder fc1 (K-pad): (NZP, 256), (1, 256)
                wd2_ref, bd2_ref,      # decoder fc2        : (256, 512), (1, 512)
                wd3_ref, bd3_ref,      # decoder fc3        : (512, D),   (1, D)
                xrec_ref, stats_ref,
                *, nz):
    bf16 = jnp.bfloat16
    x = x_ref[...].astype(bf16)

    # --- encoder fc1 + LeakyReLU(0.2) ---
    h = jnp.dot(x, w1_ref[...], preferred_element_type=jnp.float32) + b1_ref[...]
    h = _leaky_relu(h).astype(bf16)

    # --- fused mu/logvar projection: one MXU op, lane-dense (NZP-wide) output ---
    stats = jnp.dot(h, w23_ref[...], preferred_element_type=jnp.float32) + b23_ref[...]
    stats_ref[...] = stats            # mu in lanes [0, nz), logvar in [OFF, OFF+nz)

    # --- reparameterization folded into the padded tile (no cross-lane shuffle) ---
    # v: mu lanes carry mu, logvar lanes carry eps*std, all other lanes are 0.
    lane = jax.lax.broadcasted_iota(jnp.int32, stats.shape, 1)
    mu_mask = (lane < nz).astype(jnp.float32)
    v = mu_mask * stats + eps_ref[...] * jnp.exp(0.5 * stats)
    v = v.astype(bf16)

    # --- decoder ---
    # wd1_ref has wd1 duplicated in both lane blocks, so v @ wd1_ref == z @ wd1.
    d = jnp.dot(v, wd1_ref[...], preferred_element_type=jnp.float32) + bd1_ref[...]
    d = _leaky_relu(d).astype(bf16)
    d = jnp.dot(d, wd2_ref[...], preferred_element_type=jnp.float32) + bd2_ref[...]
    d = _leaky_relu(d).astype(bf16)
    d = jnp.dot(d, wd3_ref[...], preferred_element_type=jnp.float32) + bd3_ref[...]
    xrec_ref[...] = jax.nn.sigmoid(d).astype(xrec_ref.dtype)


def prepare_operands(params, nz):
    """Pack/pad/cast PyTorch-layout (f32) params into kernel operands."""
    bf16 = jnp.bfloat16
    off = _round_up(nz, 64)            # mu block [0, off), logvar block [off, 2*off)
    nzp = 2 * off                      # multiple of 128 -> lane-dense stats tile

    w23 = jnp.zeros((512, nzp), jnp.float32)
    w23 = w23.at[:, :nz].set(params["w2"])
    w23 = w23.at[:, off:off + nz].set(params["w3"])
    b23 = jnp.zeros((1, nzp), jnp.float32)
    b23 = b23.at[:, :nz].set(params["b2"])
    b23 = b23.at[:, off:off + nz].set(params["b3"])

    wd1 = jnp.zeros((nzp, 256), jnp.float32)
    wd1 = wd1.at[:nz].set(params["wd1"])
    wd1 = wd1.at[off:off + nz].set(params["wd1"])   # duplicated: v@wd1p == z@wd1

    ops = {
        "w1": params["w1"].astype(bf16), "b1": params["b1"],
        "w23": w23.astype(bf16), "b23": b23,
        "wd1": wd1.astype(bf16), "bd1": params["bd1"],
        "wd2": params["wd2"].astype(bf16), "bd2": params["bd2"],
        "wd3": params["wd3"].astype(bf16), "bd3": params["bd3"],
    }
    return ops, off, nzp


def vae_forward(x_nchw, eps, params):
    """Pallas-backed VAE forward.

    x_nchw: (B, C, H, W) with C*H*W == image_size**2
    eps:    (B, nz) standard-normal noise (torch.randn_like equivalent)
    Returns (x_recon with x_nchw's shape, mu, logvar) — all float32.
    """
    size = x_nchw.shape
    B = size[0]
    D = int(math.prod(size[1:]))
    nz = params["w2"].shape[1]
    ops, off, nzp = prepare_operands(params, nz)

    # batch tiling: weights stay VMEM-resident, activations stream per tile.
    tb = min(128, _round_up(B, 8))
    b_pad = _round_up(B, tb)
    n_tiles = b_pad // tb

    x_flat = x_nchw.reshape(B, D).astype(jnp.float32)   # torch.flatten(x, 1)
    x_p = jnp.zeros((b_pad, D), jnp.float32).at[:B].set(x_flat)
    # eps aligned with the logvar lanes of the fused stats tile; zeros elsewhere.
    eps_p = jnp.zeros((b_pad, nzp), jnp.float32).at[:B, off:off + nz].set(
        eps.astype(jnp.float32))

    operands = (
        x_p, eps_p,
        ops["w1"], ops["b1"], ops["w23"], ops["b23"],
        ops["wd1"], ops["bd1"], ops["wd2"], ops["bd2"], ops["wd3"], ops["bd3"],
    )

    tiled = lambda i: (i, 0)
    resident = lambda i: (0, 0)
    in_specs = [
        pl.BlockSpec((tb, D), tiled),
        pl.BlockSpec((tb, nzp), tiled),
        pl.BlockSpec((D, 512), resident), pl.BlockSpec((1, 512), resident),
        pl.BlockSpec((512, nzp), resident), pl.BlockSpec((1, nzp), resident),
        pl.BlockSpec((nzp, 256), resident), pl.BlockSpec((1, 256), resident),
        pl.BlockSpec((256, 512), resident), pl.BlockSpec((1, 512), resident),
        pl.BlockSpec((512, D), resident), pl.BlockSpec((1, D), resident),
    ]
    out_specs = (
        pl.BlockSpec((tb, D), tiled),
        pl.BlockSpec((tb, nzp), tiled),
    )
    out_shape = (
        jax.ShapeDtypeStruct((b_pad, D), jnp.float32),     # x_recon (flat, padded B)
        jax.ShapeDtypeStruct((b_pad, nzp), jnp.float32),   # packed mu||logvar
    )

    # advisory cost estimate for the XLA scheduler
    flops = 2 * b_pad * (D * 512 + 512 * nzp + nzp * 256 + 256 * 512 + 512 * D)
    transcendentals = b_pad * (nzp + D)
    bytes_accessed = sum(int(a.size) * a.dtype.itemsize for a in operands)
    bytes_accessed += b_pad * (D + nzp) * 4

    # explicit VMEM budget: resident weights (x2 headroom) + double-buffered streams
    weight_bytes = sum(int(a.size) * a.dtype.itemsize for a in operands[2:])
    stream_bytes = tb * (D * 4 + nzp * 4) * 2            # x/eps in + xrec/stats out
    vmem_limit = int(min(64 * 1024 * 1024,
                         max(16 * 1024 * 1024,
                             2 * weight_bytes + 4 * stream_bytes + (1 << 20))))

    xrec_p, stats = pl.pallas_call(
        functools.partial(_vae_kernel, nz=nz),
        out_shape=out_shape,
        grid=(n_tiles,),
        in_specs=in_specs,
        out_specs=out_specs,
        compiler_params=pltpu.CompilerParams(
            dimension_semantics=("parallel",),
            vmem_limit_bytes=vmem_limit,
        ),
        cost_estimate=pl.CostEstimate(
            flops=int(flops),
            transcendentals=int(transcendentals),
            bytes_accessed=int(bytes_accessed)),
    )(*operands)

    xrec = xrec_p[:B].reshape(size)
    mu = stats[:B, :nz]
    logvar = stats[:B, off:off + nz]
    return xrec, mu, logvar


def _linear_init(key, fan_in, fan_out):
    """Mimics nn.Linear default init; weight stored transposed: (fan_in, fan_out)."""
    kw, kb = jax.random.split(key)
    bound = 1.0 / math.sqrt(fan_in)
    w = jax.random.uniform(kw, (fan_in, fan_out), jnp.float32, -bound, bound)
    b = jax.random.uniform(kb, (1, fan_out), jnp.float32, -bound, bound)
    return w, b


def init_params(key, image_size, nz):
    D = image_size * image_size
    keys = jax.random.split(key, 6)
    p = {}
    p["w1"], p["b1"] = _linear_init(keys[0], D, 512)      # encoder_fc1
    p["w2"], p["b2"] = _linear_init(keys[1], 512, nz)     # encoder_fc2 (mu)
    p["w3"], p["b3"] = _linear_init(keys[2], 512, nz)     # encoder_fc3 (logvar)
    p["wd1"], p["bd1"] = _linear_init(keys[3], nz, 256)   # decoder Linear(nz, 256)
    p["wd2"], p["bd2"] = _linear_init(keys[4], 256, 512)  # decoder Linear(256, 512)
    p["wd3"], p["bd3"] = _linear_init(keys[5], 512, D)    # decoder Linear(512, D)
    return p


def reference_forward(x_nchw, eps, params):
    """Pure-JAX reference matching the PyTorch forward (with the same bf16
    weight/activation policy as the kernel, f32 accumulation)."""
    bf16 = jnp.bfloat16
    size = x_nchw.shape
    B = size[0]
    x = x_nchw.reshape(B, -1).astype(bf16)

    h = jnp.dot(x, params["w1"].astype(bf16),
                preferred_element_type=jnp.float32) + params["b1"]
    h = _leaky_relu(h).astype(bf16)
    mu = jnp.dot(h, params["w2"].astype(bf16),
                 preferred_element_type=jnp.float32) + params["b2"]
    logvar = jnp.dot(h, params["w3"].astype(bf16),
                     preferred_element_type=jnp.float32) + params["b3"]
    std = jnp.exp(0.5 * logvar)
    z = (mu + eps * std).astype(bf16)
    d = jnp.dot(z, params["wd1"].astype(bf16),
                preferred_element_type=jnp.float32) + params["bd1"]
    d = _leaky_relu(d).astype(bf16)
    d = jnp.dot(d, params["wd2"].astype(bf16),
                preferred_element_type=jnp.float32) + params["bd2"]
    d = _leaky_relu(d).astype(bf16)
    d = jnp.dot(d, params["wd3"].astype(bf16),
                preferred_element_type=jnp.float32) + params["bd3"]
    xrec = jax.nn.sigmoid(d)
    return xrec.reshape(size), mu, logvar


if __name__ == "__main__":
    image_size = 16          # D = 256
    nz = 32
    B = 2

    key = jax.random.PRNGKey(0)
    k_params, k_x, k_eps = jax.random.split(key, 3)

    params = init_params(k_params, image_size, nz)
    x = jax.random.normal(k_x, (B, 1, image_size, image_size), jnp.float32)
    # torch.randn_like(logvar) equivalent, generated as glue outside the kernel.
    eps = jax.random.normal(k_eps, (B, nz), jnp.float32)

    xrec, mu, logvar = vae_forward(x, eps, params)
    jax.block_until_ready((xrec, mu, logvar))

    # sanity check against pure-JAX reference (same bf16/f32 numerics policy)
    xrec_r, mu_r, logvar_r = reference_forward(x, eps, params)
    assert xrec.shape == x.shape and mu.shape == (B, nz) and logvar.shape == (B, nz)
    assert jnp.allclose(mu, mu_r, atol=5e-3, rtol=5e-3)
    assert jnp.allclose(logvar, logvar_r, atol=5e-3, rtol=5e-3)
    assert jnp.allclose(xrec, xrec_r, atol=3e-2, rtol=3e-2)

    print("KERNEL_OK")
</pallas_src>

<mosaic_0001>
module attributes {stable_mosaic.version = 11 : i64} {
  func.func @_vae_kernel(%arg0: i32, %arg1: memref<8x256xf32, #tpu.memory_space<vmem>>, %arg2: memref<8x128xf32, #tpu.memory_space<vmem>>, %arg3: memref<256x512xbf16, #tpu.memory_space<vmem>>, %arg4: memref<1x512xf32, #tpu.memory_space<vmem>>, %arg5: memref<512x128xbf16, #tpu.memory_space<vmem>>, %arg6: memref<1x128xf32, #tpu.memory_space<vmem>>, %arg7: memref<128x256xbf16, #tpu.memory_space<vmem>>, %arg8: memref<1x256xf32, #tpu.memory_space<vmem>>, %arg9: memref<256x512xbf16, #tpu.memory_space<vmem>>, %arg10: memref<1x512xf32, #tpu.memory_space<vmem>>, %arg11: memref<512x256xbf16, #tpu.memory_space<vmem>>, %arg12: memref<1x256xf32, #tpu.memory_space<vmem>>, %arg13: memref<8x256xf32, #tpu.memory_space<vmem>>, %arg14: memref<8x128xf32, #tpu.memory_space<vmem>>) attributes {dimension_semantics = [#tpu.dimension_semantics<parallel>], iteration_bounds = array<i64: 1>, scalar_prefetch = 0 : i64, scratch_operands = 0 : i64, tpu.core_type = #tpu.core_type<tc>, window_params = [{transform_indices = @transform_0, window_bounds = array<i64: 8, 256>}, {transform_indices = @transform_1, window_bounds = array<i64: 8, 128>}, {pipeline_mode = #tpu.pipeline_mode<synchronous>, transform_indices = @transform_2, window_bounds = array<i64: 256, 512>}, {pipeline_mode = #tpu.pipeline_mode<synchronous>, transform_indices = @transform_3, window_bounds = array<i64: 1, 512>}, {pipeline_mode = #tpu.pipeline_mode<synchronous>, transform_indices = @transform_4, window_bounds = array<i64: 512, 128>}, {pipeline_mode = #tpu.pipeline_mode<synchronous>, transform_indices = @transform_5, window_bounds = array<i64: 1, 128>}, {pipeline_mode = #tpu.pipeline_mode<synchronous>, transform_indices = @transform_6, window_bounds = array<i64: 128, 256>}, {pipeline_mode = #tpu.pipeline_mode<synchronous>, transform_indices = @transform_7, window_bounds = array<i64: 1, 256>}, {pipeline_mode = #tpu.pipeline_mode<synchronous>, transform_indices = @transform_8, window_bounds = array<i64: 256, 512>}, {pipeline_mode = #tpu.pipeline_mode<synchronous>, transform_indices = @transform_9, window_bounds = array<i64: 1, 512>}, {pipeline_mode = #tpu.pipeline_mode<synchronous>, transform_indices = @transform_10, window_bounds = array<i64: 512, 256>}, {pipeline_mode = #tpu.pipeline_mode<synchronous>, transform_indices = @transform_11, window_bounds = array<i64: 1, 256>}, {transform_indices = @transform_12, window_bounds = array<i64: 8, 256>}, {transform_indices = @transform_13, window_bounds = array<i64: 8, 128>}]} {
    %c0 = arith.constant 0 : index
    %c0_0 = arith.constant 0 : index
    %0 = vector.load %arg1[%c0, %c0_0] : memref<8x256xf32, #tpu.memory_space<vmem>>, vector<8x256xf32>
    %1 = arith.truncf %0 : vector<8x256xf32> to vector<8x256xbf16>
    %c0_1 = arith.constant 0 : index
    %c0_2 = arith.constant 0 : index
    %2 = vector.load %arg3[%c0_1, %c0_2] : memref<256x512xbf16, #tpu.memory_space<vmem>>, vector<256x512xbf16>
    %cst = arith.constant dense<0.000000e+00> : vector<8x512xf32>
    %3 = tpu.matmul %1, %2, %cst {dimension_numbers = #tpu.dot_dimension_numbers<[1], [0], [0], [1], [0, 0, 1, 1], [], []>} : vector<8x256xbf16>, vector<256x512xbf16>, vector<8x512xf32> -> vector<8x512xf32>
    %c0_3 = arith.constant 0 : index
    %c0_4 = arith.constant 0 : index
    %4 = vector.load %arg4[%c0_3, %c0_4] : memref<1x512xf32, #tpu.memory_space<vmem>>, vector<1x512xf32>
    %5 = vector.broadcast %4 : vector<1x512xf32> to vector<8x512xf32>
    %6 = arith.addf %3, %5 : vector<8x512xf32>
    %cst_5 = arith.constant 0.000000e+00 : f32
    %7 = vector.broadcast %cst_5 : f32 to vector<8x512xf32>
    %8 = arith.cmpf ogt, %6, %7 : vector<8x512xf32>
    %cst_6 = arith.constant 2.000000e-01 : f32
    %9 = vector.broadcast %cst_6 : f32 to vector<8x512xf32>
    %10 = arith.mulf %9, %6 : vector<8x512xf32>
    %11 = arith.select %8, %6, %10 : vector<8x512xi1>, vector<8x512xf32>
    %12 = arith.truncf %11 : vector<8x512xf32> to vector<8x512xbf16>
    %c0_7 = arith.constant 0 : index
    %c0_8 = arith.constant 0 : index
    %13 = vector.load %arg5[%c0_7, %c0_8] : memref<512x128xbf16, #tpu.memory_space<vmem>>, vector<512x128xbf16>
    %cst_9 = arith.constant dense<0.000000e+00> : vector<8x128xf32>
    %14 = tpu.matmul %12, %13, %cst_9 {dimension_numbers = #tpu.dot_dimension_numbers<[1], [0], [0], [1], [0, 0, 1, 1], [], []>} : vector<8x512xbf16>, vector<512x128xbf16>, vector<8x128xf32> -> vector<8x128xf32>
    %c0_10 = arith.constant 0 : index
    %c0_11 = arith.constant 0 : index
    %15 = vector.load %arg6[%c0_10, %c0_11] : memref<1x128xf32, #tpu.memory_space<vmem>>, vector<1x128xf32>
    %16 = vector.broadcast %15 : vector<1x128xf32> to vector<8x128xf32>
    %17 = arith.addf %14, %16 : vector<8x128xf32>
    %c0_12 = arith.constant 0 : index
    %c0_13 = arith.constant 0 : index
    %18 = vector.load %arg14[%c0_12, %c0_13] : memref<8x128xf32, #tpu.memory_space<vmem>>, vector<8x128xf32>
    tpu.vector_store %arg14[%c0_12, %c0_13], %17 {strides = array<i32>} : memref<8x128xf32, #tpu.memory_space<vmem>>, vector<8x128xf32>,
    %19 = tpu.iota {dimensions = array<i32: 1>} : vector<8x128xi32>
    %c32_i32 = arith.constant 32 : i32
    %20 = vector.broadcast %c32_i32 : i32 to vector<8x128xi32>
    %21 = arith.cmpi slt, %19, %20 : vector<8x128xi32>
    %22 = arith.extui %21 : vector<8x128xi1> to vector<8x128xi32>
    %23 = arith.sitofp %22 : vector<8x128xi32> to vector<8x128xf32>
    %24 = arith.mulf %23, %17 : vector<8x128xf32>
    %c0_14 = arith.constant 0 : index
    %c0_15 = arith.constant 0 : index
    %25 = vector.load %arg2[%c0_14, %c0_15] : memref<8x128xf32, #tpu.memory_space<vmem>>, vector<8x128xf32>
    %cst_16 = arith.constant 5.000000e-01 : f32
    %26 = vector.broadcast %cst_16 : f32 to vector<8x128xf32>
    %27 = arith.mulf %26, %17 : vector<8x128xf32>
    %28 = math.exp %27 : vector<8x128xf32>
    %29 = arith.mulf %25, %28 : vector<8x128xf32>
    %30 = arith.addf %24, %29 : vector<8x128xf32>
    %31 = arith.truncf %30 : vector<8x128xf32> to vector<8x128xbf16>
    %c0_17 = arith.constant 0 : index
    %c0_18 = arith.constant 0 : index
    %32 = vector.load %arg7[%c0_17, %c0_18] : memref<128x256xbf16, #tpu.memory_space<vmem>>, vector<128x256xbf16>
    %cst_19 = arith.constant dense<0.000000e+00> : vector<8x256xf32>
    %33 = tpu.matmul %31, %32, %cst_19 {dimension_numbers = #tpu.dot_dimension_numbers<[1], [0], [0], [1], [0, 0, 1, 1], [], []>} : vector<8x128xbf16>, vector<128x256xbf16>, vector<8x256xf32> -> vector<8x256xf32>
    %c0_20 = arith.constant 0 : index
    %c0_21 = arith.constant 0 : index
    %34 = vector.load %arg8[%c0_20, %c0_21] : memref<1x256xf32, #tpu.memory_space<vmem>>, vector<1x256xf32>
    %35 = vector.broadcast %34 : vector<1x256xf32> to vector<8x256xf32>
    %36 = arith.addf %33, %35 : vector<8x256xf32>
    %cst_22 = arith.constant 0.000000e+00 : f32
    %37 = vector.broadcast %cst_22 : f32 to vector<8x256xf32>
    %38 = arith.cmpf ogt, %36, %37 : vector<8x256xf32>
    %cst_23 = arith.constant 2.000000e-01 : f32
    %39 = vector.broadcast %cst_23 : f32 to vector<8x256xf32>
    %40 = arith.mulf %39, %36 : vector<8x256xf32>
    %41 = arith.select %38, %36, %40 : vector<8x256xi1>, vector<8x256xf32>
    %42 = arith.truncf %41 : vector<8x256xf32> to vector<8x256xbf16>
    %c0_24 = arith.constant 0 : index
    %c0_25 = arith.constant 0 : index
    %43 = vector.load %arg9[%c0_24, %c0_25] : memref<256x512xbf16, #tpu.memory_space<vmem>>, vector<256x512xbf16>
    %cst_26 = arith.constant dense<0.000000e+00> : vector<8x512xf32>
    %44 = tpu.matmul %42, %43, %cst_26 {dimension_numbers = #tpu.dot_dimension_numbers<[1], [0], [0], [1], [0, 0, 1, 1], [], []>} : vector<8x256xbf16>, vector<256x512xbf16>, vector<8x512xf32> -> vector<8x512xf32>
    %c0_27 = arith.constant 0 : index
    %c0_28 = arith.constant 0 : index
    %45 = vector.load %arg10[%c0_27, %c0_28] : memref<1x512xf32, #tpu.memory_space<vmem>>, vector<1x512xf32>
    %46 = vector.broadcast %45 : vector<1x512xf32> to vector<8x512xf32>
    %47 = arith.addf %44, %46 : vector<8x512xf32>
    %cst_29 = arith.constant 0.000000e+00 : f32
    %48 = vector.broadcast %cst_29 : f32 to vector<8x512xf32>
    %49 = arith.cmpf ogt, %47, %48 : vector<8x512xf32>
    %cst_30 = arith.constant 2.000000e-01 : f32
    %50 = vector.broadcast %cst_30 : f32 to vector<8x512xf32>
    %51 = arith.mulf %50, %47 : vector<8x512xf32>
    %52 = arith.select %49, %47, %51 : vector<8x512xi1>, vector<8x512xf32>
    %53 = arith.truncf %52 : vector<8x512xf32> to vector<8x512xbf16>
    %c0_31 = arith.constant 0 : index
    %c0_32 = arith.constant 0 : index
    %54 = vector.load %arg11[%c0_31, %c0_32] : memref<512x256xbf16, #tpu.memory_space<vmem>>, vector<512x256xbf16>
    %cst_33 = arith.constant dense<0.000000e+00> : vector<8x256xf32>
    %55 = tpu.matmul %53, %54, %cst_33 {dimension_numbers = #tpu.dot_dimension_numbers<[1], [0], [0], [1], [0, 0, 1, 1], [], []>} : vector<8x512xbf16>, vector<512x256xbf16>, vector<8x256xf32> -> vector<8x256xf32>
    %c0_34 = arith.constant 0 : index
    %c0_35 = arith.constant 0 : index
    %56 = vector.load %arg12[%c0_34, %c0_35] : memref<1x256xf32, #tpu.memory_space<vmem>>, vector<1x256xf32>
    %57 = vector.broadcast %56 : vector<1x256xf32> to vector<8x256xf32>
    %58 = arith.addf %55, %57 : vector<8x256xf32>
    %59 = arith.negf %58 : vector<8x256xf32>
    %60 = math.exp %59 : vector<8x256xf32>
    %cst_36 = arith.constant 1.000000e+00 : f32
    %61 = vector.broadcast %cst_36 : f32 to vector<8x256xf32>
    %62 = arith.addf %61, %60 : vector<8x256xf32>
    %63 = arith.divf %61, %62 : vector<8x256xf32>
    %c0_37 = arith.constant 0 : index
    %c0_38 = arith.constant 0 : index
    %64 = vector.load %arg13[%c0_37, %c0_38] : memref<8x256xf32, #tpu.memory_space<vmem>>, vector<8x256xf32>
    tpu.vector_store %arg13[%c0_37, %c0_38], %63 {strides = array<i32>} : memref<8x256xf32, #tpu.memory_space<vmem>>, vector<8x256xf32>,
    return
  }
  func.func @transform_0(%arg0: i32) -> (i32, i32) {
    %c0_i32 = arith.constant 0 : i32
    %c0_i32_0 = arith.constant 0 : i32
    return %arg0, %c0_i32 : i32, i32
  }
  func.func @transform_1(%arg0: i32) -> (i32, i32) {
    %c0_i32 = arith.constant 0 : i32
    %c0_i32_0 = arith.constant 0 : i32
    return %arg0, %c0_i32 : i32, i32
  }
  func.func @transform_2(%arg0: i32) -> (i32, i32) {
    %c0_i32 = arith.constant 0 : i32
    %c0_i32_0 = arith.constant 0 : i32
    %c0_i32_1 = arith.constant 0 : i32
    return %c0_i32, %c0_i32_0 : i32, i32
  }
  func.func @transform_3(%arg0: i32) -> (i32, i32) {
    %c0_i32 = arith.constant 0 : i32
    %c0_i32_0 = arith.constant 0 : i32
    %c0_i32_1 = arith.constant 0 : i32
    return %c0_i32, %c0_i32_0 : i32, i32
  }
  func.func @transform_4(%arg0: i32) -> (i32, i32) {
    %c0_i32 = arith.constant 0 : i32
    %c0_i32_0 = arith.constant 0 : i32
    %c0_i32_1 = arith.constant 0 : i32
    return %c0_i32, %c0_i32_0 : i32, i32
  }
  func.func @transform_5(%arg0: i32) -> (i32, i32) {
    %c0_i32 = arith.constant 0 : i32
    %c0_i32_0 = arith.constant 0 : i32
    %c0_i32_1 = arith.constant 0 : i32
    return %c0_i32, %c0_i32_0 : i32, i32
  }
  func.func @transform_6(%arg0: i32) -> (i32, i32) {
    %c0_i32 = arith.constant 0 : i32
    %c0_i32_0 = arith.constant 0 : i32
    %c0_i32_1 = arith.constant 0 : i32
    return %c0_i32, %c0_i32_0 : i32, i32
  }
  func.func @transform_7(%arg0: i32) -> (i32, i32) {
    %c0_i32 = arith.constant 0 : i32
    %c0_i32_0 = arith.constant 0 : i32
    %c0_i32_1 = arith.constant 0 : i32
    return %c0_i32, %c0_i32_0 : i32, i32
  }
  func.func @transform_8(%arg0: i32) -> (i32, i32) {
    %c0_i32 = arith.constant 0 : i32
    %c0_i32_0 = arith.constant 0 : i32
    %c0_i32_1 = arith.constant 0 : i32
    return %c0_i32, %c0_i32_0 : i32, i32
  }
  func.func @transform_9(%arg0: i32) -> (i32, i32) {
    %c0_i32 = arith.constant 0 : i32
    %c0_i32_0 = arith.constant 0 : i32
    %c0_i32_1 = arith.constant 0 : i32
    return %c0_i32, %c0_i32_0 : i32, i32
  }
  func.func @transform_10(%arg0: i32) -> (i32, i32) {
    %c0_i32 = arith.constant 0 : i32
    %c0_i32_0 = arith.constant 0 : i32
    %c0_i32_1 = arith.constant 0 : i32
    return %c0_i32, %c0_i32_0 : i32, i32
  }
  func.func @transform_11(%arg0: i32) -> (i32, i32) {
    %c0_i32 = arith.constant 0 : i32
    %c0_i32_0 = arith.constant 0 : i32
    %c0_i32_1 = arith.constant 0 : i32
    return %c0_i32, %c0_i32_0 : i32, i32
  }
  func.func @transform_12(%arg0: i32) -> (i32, i32) {
    %c0_i32 = arith.constant 0 : i32
    %c0_i32_0 = arith.constant 0 : i32
    return %arg0, %c0_i32 : i32, i32
  }
  func.func @transform_13(%arg0: i32) -> (i32, i32) {
    %c0_i32 = arith.constant 0 : i32
    %c0_i32_0 = arith.constant 0 : i32
    return %arg0, %c0_i32 : i32, i32
  }
}

</mosaic_0001>

<llo_original>
// kernel: tpu_custom_call.1
$region0: #{tpu_custom_call.1}
  #allocation0 [shape = 'u32[]', space=smem, size = 0x4, offset = 0x4, fixed_abs, tag = 'smem constant byte address 0x4 - core index']
  #allocation1 [shape = 'u32[72,128]{1,0:T(1,128)}', space=vmem, size = 0x9000, scoped, tag = 'internal scratch']
  %s0 = inlined_call_operand.hbm [shape: f32[8,256], index: 0, kind: input, shape index: {}]
  %s1 = inlined_call_operand.hbm [shape: f32[8,128], index: 1, kind: input, shape index: {}]
  %s2 = inlined_call_operand.hbm [shape: bf16[256,512], index: 2, kind: input, shape index: {}]
  %s3 = inlined_call_operand.hbm [shape: f32[1,512], index: 3, kind: input, shape index: {}]
  %s4 = inlined_call_operand.hbm [shape: bf16[512,128], index: 4, kind: input, shape index: {}]
  %s5 = inlined_call_operand.hbm [shape: f32[1,128], index: 5, kind: input, shape index: {}]
  %s6 = inlined_call_operand.hbm [shape: bf16[128,256], index: 6, kind: input, shape index: {}]
  %s7 = inlined_call_operand.vmem [shape: f32[1,256], index: 7, kind: input, shape index: {}]
  %s8 = inlined_call_operand.hbm [shape: bf16[256,512], index: 8, kind: input, shape index: {}]
  %s9 = inlined_call_operand.vmem [shape: f32[1,512], index: 9, kind: input, shape index: {}]
  %s10 = inlined_call_operand.hbm [shape: bf16[512,256], index: 10, kind: input, shape index: {}]
  %s11 = inlined_call_operand.vmem [shape: f32[1,256], index: 11, kind: input, shape index: {}]
  %s12 = inlined_call_operand.hbm [shape: f32[8,256], index: 12, kind: output, shape index: {0}]
  %s13 = inlined_call_operand.hbm [shape: f32[8,128], index: 13, kind: output, shape index: {1}]
  %14 = xla_tuple %s12, %s13
  %s15 = sld [smem:[#allocation0]]
  $region102: #{tpu_custom_call.1} parent=0
    _
  %s17 = ssub.s32 1, %s15
  %s18 = scalar_select 0, %s17, %s15
  $region1: #{tpu_custom_call.1} parent=0
    #allocation2 [shape = 'u8[8192]{0}', space=vmem, size = 0x2000, scoped, tag = 'input window, operand 0, single buffered']
    #allocation3 [shape = 's32[1]{0}', space=sflag, size = 0x4, scoped, tag = 'scoped memory for tpu_custom_call.1']
    #allocation4 [shape = 's32[1]{0}', space=sflag, size = 0x4, scoped, tag = 'scoped memory for tpu_custom_call.1']
    #allocation5 [shape = 'u8[4096]{0}', space=vmem, size = 0x1000, scoped, tag = 'input window, operand 1, single buffered']
    #allocation6 [shape = 's32[1]{0}', space=sflag, size = 0x4, scoped, tag = 'scoped memory for tpu_custom_call.1']
    #allocation7 [shape = 'u8[262144]{0}', space=vmem, size = 0x40000, scoped, tag = 'input window, operand 2, single buffered']
    #allocation8 [shape = 'u8[2048]{0}', space=vmem, size = 0x800, scoped, tag = 'input window, operand 3, single buffered']
    #allocation9 [shape = 's32[1]{0}', space=sflag, size = 0x4, scoped, tag = 'scoped memory for tpu_custom_call.1']
    #allocation10 [shape = 'u8[131072]{0}', space=vmem, size = 0x20000, scoped, tag = 'input window, operand 4, single buffered']
    #allocation11 [shape = 'u8[512]{0}', space=vmem, size = 0x400, scoped, tag = 'input window, operand 5, single buffered']
    #allocation12 [shape = 's32[1]{0}', space=sflag, size = 0x4, scoped, tag = 'scoped memory for tpu_custom_call.1']
    #allocation13 [shape = 'u8[65536]{0}', space=vmem, size = 0x10000, scoped, tag = 'input window, operand 6, single buffered']
    #allocation14 [shape = 'u8[262144]{0}', space=vmem, size = 0x40000, scoped, tag = 'input window, operand 8, single buffered']
    #allocation15 [shape = 's32[1]{0}', space=sflag, size = 0x4, scoped, tag = 'scoped memory for tpu_custom_call.1']
    #allocation16 [shape = 'u8[262144]{0}', space=vmem, size = 0x40000, scoped, tag = 'input window, operand 10, single buffered']
    #allocation17 [shape = 'u8[8192]{0}', space=vmem, size = 0x2000, scoped, tag = 'output window, operand 0, single buffered']
    #allocation18 [shape = 'u8[4096]{0}', space=vmem, size = 0x1000, scoped, tag = 'output window, operand 1, single buffered']
    #allocation19 [shape = 's32[1]{0}', space=sflag, size = 0x4, scoped, tag = 'scoped memory for tpu_custom_call.1']
    %19 = vsyncpa [#allocation3], 0
    %20 = vsyncpa [#allocation6], 0
    %21 = vsyncpa [#allocation9], 0
    %22 = vsyncpa [#allocation12], 0
    %23 = vsyncpa [#allocation15], 0
    %24 = vsyncpa [#allocation4], 0
    %25 = vsyncpa [#allocation19], 0
    // Predicated region
    $region2: #{tpu_custom_call.1} parent=1 // pred_check
      _
    $region3: #{tpu_custom_call.1} parent=1 // pred_check_branch
      %27 = sbr.rel (0) target = $region5
    $region4: #{tpu_custom_call.1} parent=1 // pred_region
      %29 = vsyncadd [#allocation3], 0
      %s31 = sshll.u32 %s0, 4
      %s32 = int_to_ptr.hbm [resolvable:$true] %s31
      %s33 = sshll.u32 [#allocation2], 4
      %s34 = int_to_ptr.vmem [resolvable:$true] %s33
      %36 = dma.hbm_to_vmem [thread:$0]  %s32, 256, %s34, [#allocation3]
    $region5: #{tpu_custom_call.1} parent=1 // pred_fallthru
      _
    // Predicated region
    $region6: #{tpu_custom_call.1} parent=1 // pred_check
      _
    $region7: #{tpu_custom_call.1} parent=1 // pred_check_branch
      %38 = sbr.rel (0) target = $region9
    $region8: #{tpu_custom_call.1} parent=1 // pred_region
      %40 = vsyncadd [#allocation6], 0
      %s42 = sshll.u32 %s1, 4
      %s43 = int_to_ptr.hbm [resolvable:$true] %s42
      %s44 = sshll.u32 [#allocation5], 4
      %s45 = int_to_ptr.vmem [resolvable:$true] %s44
      %47 = dma.hbm_to_vmem [thread:$0]  %s43, 128, %s45, [#allocation6]
    $region9: #{tpu_custom_call.1} parent=1 // pred_fallthru
      _
    // Predicated region
    $region10: #{tpu_custom_call.1} parent=1 // pred_check
      _
    $region11: #{tpu_custom_call.1} parent=1 // pred_check_branch
      %49 = sbr.rel (0) target = $region13
    $region12: #{tpu_custom_call.1} parent=1 // pred_region
      %51 = vsyncadd [#allocation6], 0
      %s52 = sshll.u32 %s2, 4
      %s53 = int_to_ptr.hbm [resolvable:$true] %s52
      %s54 = sshll.u32 [#allocation7], 4
      %s55 = int_to_ptr.vmem [resolvable:$true] %s54
      %60 = dma.hbm_to_vmem [thread:$0]  %s53, 8192, %s55, [#allocation6], 256, 256, 16
    $region13: #{tpu_custom_call.1} parent=1 // pred_fallthru
      _
    // Predicated region
    $region14: #{tpu_custom_call.1} parent=1 // pred_check
      _
    $region15: #{tpu_custom_call.1} parent=1 // pred_check_branch
      %62 = sbr.rel (0) target = $region17
    $region16: #{tpu_custom_call.1} parent=1 // pred_region
      %64 = vsyncadd [#allocation9], 0
      %s66 = sshll.u32 %s3, 4
      %s67 = int_to_ptr.hbm [resolvable:$true] %s66
      %s68 = sshll.u32 [#allocation8], 4
      %s69 = int_to_ptr.vmem [resolvable:$true] %s68
      %71 = dma.hbm_to_vmem [thread:$0]  %s67, 64, %s69, [#allocation9]
    $region17: #{tpu_custom_call.1} parent=1 // pred_fallthru
      _
    // Predicated region
    $region18: #{tpu_custom_call.1} parent=1 // pred_check
      _
    $region19: #{tpu_custom_call.1} parent=1 // pred_check_branch
      %73 = sbr.rel (0) target = $region21
    $region20: #{tpu_custom_call.1} parent=1 // pred_region
      %75 = vsyncadd [#allocation9], 0
      %s76 = sshll.u32 %s4, 4
      %s77 = int_to_ptr.hbm [resolvable:$true] %s76
      %s78 = sshll.u32 [#allocation10], 4
      %s79 = int_to_ptr.vmem [resolvable:$true] %s78
      %84 = dma.hbm_to_vmem [thread:$0]  %s77, 4096, %s79, [#allocation9], 64, 64, 4
    $region21: #{tpu_custom_call.1} parent=1 // pred_fallthru
      _
    // Predicated region
    $region22: #{tpu_custom_call.1} parent=1 // pred_check
      _
    $region23: #{tpu_custom_call.1} parent=1 // pred_check_branch
      %86 = sbr.rel (0) target = $region25
    $region24: #{tpu_custom_call.1} parent=1 // pred_region
      %88 = vsyncadd [#allocation12], 0
      %s90 = sshll.u32 %s5, 4
      %s91 = int_to_ptr.hbm [resolvable:$true] %s90
      %s92 = sshll.u32 [#allocation11], 4
      %s93 = int_to_ptr.vmem [resolvable:$true] %s92
      %95 = dma.hbm_to_vmem [thread:$0]  %s91, 16, %s93, [#allocation12]
    $region25: #{tpu_custom_call.1} parent=1 // pred_fallthru
      _
    // Predicated region
    $region26: #{tpu_custom_call.1} parent=1 // pred_check
      _
    $region27: #{tpu_custom_call.1} parent=1 // pred_check_branch
      %97 = sbr.rel (0) target = $region29
    $region28: #{tpu_custom_call.1} parent=1 // pred_region
      %99 = vsyncadd [#allocation12], 0
      %s100 = sshll.u32 %s6, 4
      %s101 = int_to_ptr.hbm [resolvable:$true] %s100
      %s102 = sshll.u32 [#allocation13], 4
      %s103 = int_to_ptr.vmem [resolvable:$true] %s102
      %108 = dma.hbm_to_vmem [thread:$0]  %s101, 2048, %s103, [#allocation12], 128, 128, 8
    $region29: #{tpu_custom_call.1} parent=1 // pred_fallthru
      _
    // Predicated region
    $region30: #{tpu_custom_call.1} parent=1 // pred_check
      _
    $region31: #{tpu_custom_call.1} parent=1 // pred_check_branch
      %110 = sbr.rel (0) target = $region33
    $region32: #{tpu_custom_call.1} parent=1 // pred_region
      _
    $region33: #{tpu_custom_call.1} parent=1 // pred_fallthru
      _
    // Predicated region
    $region34: #{tpu_custom_call.1} parent=1 // pred_check
      _
    $region35: #{tpu_custom_call.1} parent=1 // pred_check_branch
      %112 = sbr.rel (0) target = $region37
    $region36: #{tpu_custom_call.1} parent=1 // pred_region
      %114 = vsyncadd [#allocation15], 0
      %s115 = sshll.u32 %s8, 4
      %s116 = int_to_ptr.hbm [resolvable:$true] %s115
      %s117 = sshll.u32 [#allocation14], 4
      %s118 = int_to_ptr.vmem [resolvable:$true] %s117
      %123 = dma.hbm_to_vmem [thread:$0]  %s116, 8192, %s118, [#allocation15], 256, 256, 16
    $region37: #{tpu_custom_call.1} parent=1 // pred_fallthru
      _
    // Predicated region
    $region38: #{tpu_custom_call.1} parent=1 // pred_check
      _
    $region39: #{tpu_custom_call.1} parent=1 // pred_check_branch
      %125 = sbr.rel (0) target = $region41
    $region40: #{tpu_custom_call.1} parent=1 // pred_region
      _
    $region41: #{tpu_custom_call.1} parent=1 // pred_fallthru
      _
    // Predicated region
    $region42: #{tpu_custom_call.1} parent=1 // pred_check
      _
    $region43: #{tpu_custom_call.1} parent=1 // pred_check_branch
      %127 = sbr.rel (0) target = $region45
    $region44: #{tpu_custom_call.1} parent=1 // pred_region
      %129 = vsyncadd [#allocation15], 0
      %s130 = sshll.u32 %s10, 4
      %s131 = int_to_ptr.hbm [resolvable:$true] %s130
      %s132 = sshll.u32 [#allocation16], 4
      %s133 = int_to_ptr.vmem [resolvable:$true] %s132
      %138 = dma.hbm_to_vmem [thread:$0]  %s131, 8192, %s133, [#allocation15], 128, 128, 8
    $region45: #{tpu_custom_call.1} parent=1 // pred_fallthru
      _
    // Predicated region
    $region46: #{tpu_custom_call.1} parent=1 // pred_check
      _
    $region47: #{tpu_custom_call.1} parent=1 // pred_check_branch
      %140 = sbr.rel (0) target = $region49
    $region48: #{tpu_custom_call.1} parent=1 // pred_region
      _
    $region49: #{tpu_custom_call.1} parent=1 // pred_fallthru
      _
    // Predicated region
    $region50: #{tpu_custom_call.1} parent=1 // pred_check
      _
    $region51: #{tpu_custom_call.1} parent=1 // pred_check_branch
      %142 = sbr.rel (0) target = $region53
    $region52: #{tpu_custom_call.1} parent=1 // pred_region
      %144 = dma.done [#allocation3], 256
    $region53: #{tpu_custom_call.1} parent=1 // pred_fallthru
      _
    // Predicated region
    $region54: #{tpu_custom_call.1} parent=1 // pred_check
      _
    $region55: #{tpu_custom_call.1} parent=1 // pred_check_branch
      %146 = sbr.rel (0) target = $region57
    $region56: #{tpu_custom_call.1} parent=1 // pred_region
      %148 = dma.done [#allocation6], 128
    $region57: #{tpu_custom_call.1} parent=1 // pred_fallthru
      _
    // Predicated region
    $region58: #{tpu_custom_call.1} parent=1 // pred_check
      _
    $region59: #{tpu_custom_call.1} parent=1 // pred_check_branch
      %150 = sbr.rel (0) target = $region61
    $region60: #{tpu_custom_call.1} parent=1 // pred_region
      %152 = dma.done [#allocation6], 8192
    $region61: #{tpu_custom_call.1} parent=1 // pred_fallthru
      _
    // Predicated region
    $region62: #{tpu_custom_call.1} parent=1 // pred_check
      _
    $region63: #{tpu_custom_call.1} parent=1 // pred_check_branch
      %154 = sbr.rel (0) target = $region65
    $region64: #{tpu_custom_call.1} parent=1 // pred_region
      %156 = dma.done [#allocation9], 64
    $region65: #{tpu_custom_call.1} parent=1 // pred_fallthru
      _
    // Predicated region
    $region66: #{tpu_custom_call.1} parent=1 // pred_check
      _
    $region67: #{tpu_custom_call.1} parent=1 // pred_check_branch
      %158 = sbr.rel (0) target = $region69
    $region68: #{tpu_custom_call.1} parent=1 // pred_region
      %160 = dma.done [#allocation9], 4096
    $region69: #{tpu_custom_call.1} parent=1 // pred_fallthru
      _
    // Predicated region
    $region70: #{tpu_custom_call.1} parent=1 // pred_check
      _
    $region71: #{tpu_custom_call.1} parent=1 // pred_check_branch
      %162 = sbr.rel (0) target = $region73
    $region72: #{tpu_custom_call.1} parent=1 // pred_region
      %164 = dma.done [#allocation12], 16
    $region73: #{tpu_custom_call.1} parent=1 // pred_fallthru
      _
    // Predicated region
    $region74: #{tpu_custom_call.1} parent=1 // pred_check
      _
    $region75: #{tpu_custom_call.1} parent=1 // pred_check_branch
      %166 = sbr.rel (0) target = $region77
    $region76: #{tpu_custom_call.1} parent=1 // pred_region
      %168 = dma.done [#allocation12], 2048
    $region77: #{tpu_custom_call.1} parent=1 // pred_fallthru
      _
    // Predicated region
    $region78: #{tpu_custom_call.1} parent=1 // pred_check
      _
    $region79: #{tpu_custom_call.1} parent=1 // pred_check_branch
      %170 = sbr.rel (0) target = $region81
    $region80: #{tpu_custom_call.1} parent=1 // pred_region
      %172 = dma.done [#allocation15], 8192
    $region81: #{tpu_custom_call.1} parent=1 // pred_fallthru
      _
    // Predicated region
    $region82: #{tpu_custom_call.1} parent=1 // pred_check
      _
    $region83: #{tpu_custom_call.1} parent=1 // pred_check_branch
      %174 = sbr.rel (0) target = $region85
    $region84: #{tpu_custom_call.1} parent=1 // pred_region
      %176 = dma.done [#allocation15], 8192
    $region85: #{tpu_custom_call.1} parent=1 // pred_fallthru
      _
    %v177 = vld [vmem:[#allocation2] sm:$0xff]
    %v178 = vld [vmem:[#allocation2 + $0x8] sm:$0xff]
    %v179 = vpack.c.bf16 %v177, %v177
    %v180 = vpack.c.bf16 %v178, %v178
    %v181 = vld [vmem:[#allocation7] sm:$0xff]
    %v182 = vld [vmem:[#allocation7 + $0x8] sm:$0xff]
    %v183 = vld [vmem:[#allocation7 + $0x10] sm:$0xff]
    %v184 = vld [vmem:[#allocation7 + $0x18] sm:$0xff]
    %v185 = vld [vmem:[#allocation7 + $0x20] sm:$0xff]
    %v186 = vld [vmem:[#allocation7 + $0x28] sm:$0xff]
    %v187 = vld [vmem:[#allocation7 + $0x30] sm:$0xff]
    %v188 = vld [vmem:[#allocation7 + $0x38] sm:$0xff]
    %v189 = vld [vmem:[#allocation7 + $0x40] sm:$0xff]
    %v190 = vld [vmem:[#allocation7 + $0x48] sm:$0xff]
    %v191 = vld [vmem:[#allocation7 + $0x50] sm:$0xff]
    %v192 = vld [vmem:[#allocation7 + $0x58] sm:$0xff]
    %v193 = vld [vmem:[#allocation7 + $0x60] sm:$0xff]
    %v194 = vld [vmem:[#allocation7 + $0x68] sm:$0xff]
    %v195 = vld [vmem:[#allocation7 + $0x70] sm:$0xff]
    %v196 = vld [vmem:[#allocation7 + $0x78] sm:$0xff]
    %v197 = vld [vmem:[#allocation7 + $0x80] sm:$0xff]
    %v198 = vld [vmem:[#allocation7 + $0x88] sm:$0xff]
    %v199 = vld [vmem:[#allocation7 + $0x90] sm:$0xff]
    %v200 = vld [vmem:[#allocation7 + $0x98] sm:$0xff]
    %v201 = vld [vmem:[#allocation7 + $0xa0] sm:$0xff]
    %v202 = vld [vmem:[#allocation7 + $0xa8] sm:$0xff]
    %v203 = vld [vmem:[#allocation7 + $0xb0] sm:$0xff]
    %v204 = vld [vmem:[#allocation7 + $0xb8] sm:$0xff]
    %v205 = vld [vmem:[#allocation7 + $0xc0] sm:$0xff]
    %v206 = vld [vmem:[#allocation7 + $0xc8] sm:$0xff]
    %v207 = vld [vmem:[#allocation7 + $0xd0] sm:$0xff]
    %v208 = vld [vmem:[#allocation7 + $0xd8] sm:$0xff]
    %v209 = vld [vmem:[#allocation7 + $0xe0] sm:$0xff]
    %v210 = vld [vmem:[#allocation7 + $0xe8] sm:$0xff]
    %v211 = vld [vmem:[#allocation7 + $0xf0] sm:$0xff]
    %v212 = vld [vmem:[#allocation7 + $0xf8] sm:$0xff]
    %v213 = vld [vmem:[#allocation7 + $0x100] sm:$0xff]
    %v214 = vld [vmem:[#allocation7 + $0x108] sm:$0xff]
    %v215 = vld [vmem:[#allocation7 + $0x110] sm:$0xff]
    %v216 = vld [vmem:[#allocation7 + $0x118] sm:$0xff]
    %v217 = vld [vmem:[#allocation7 + $0x120] sm:$0xff]
    %v218 = vld [vmem:[#allocation7 + $0x128] sm:$0xff]
    %v219 = vld [vmem:[#allocation7 + $0x130] sm:$0xff]
    %v220 = vld [vmem:[#allocation7 + $0x138] sm:$0xff]
    %v221 = vld [vmem:[#allocation7 + $0x140] sm:$0xff]
    %v222 = vld [vmem:[#allocation7 + $0x148] sm:$0xff]
    %v223 = vld [vmem:[#allocation7 + $0x150] sm:$0xff]
    %v224 = vld [vmem:[#allocation7 + $0x158] sm:$0xff]
    %v225 = vld [vmem:[#allocation7 + $0x160] sm:$0xff]
    %v226 = vld [vmem:[#allocation7 + $0x168] sm:$0xff]
    %v227 = vld [vmem:[#allocation7 + $0x170] sm:$0xff]
    %v228 = vld [vmem:[#allocation7 + $0x178] sm:$0xff]
    %v229 = vld [vmem:[#allocation7 + $0x180] sm:$0xff]
    %v230 = vld [vmem:[#allocation7 + $0x188] sm:$0xff]
    %v231 = vld [vmem:[#allocation7 + $0x190] sm:$0xff]
    %v232 = vld [vmem:[#allocation7 + $0x198] sm:$0xff]
    %v233 = vld [vmem:[#allocation7 + $0x1a0] sm:$0xff]
    %v234 = vld [vmem:[#allocation7 + $0x1a8] sm:$0xff]
    %v235 = vld [vmem:[#allocation7 + $0x1b0] sm:$0xff]
    %v236 = vld [vmem:[#allocation7 + $0x1b8] sm:$0xff]
    %v237 = vld [vmem:[#allocation7 + $0x1c0] sm:$0xff]
    %v238 = vld [vmem:[#allocation7 + $0x1c8] sm:$0xff]
    %v239 = vld [vmem:[#allocation7 + $0x1d0] sm:$0xff]
    %v240 = vld [vmem:[#allocation7 + $0x1d8] sm:$0xff]
    %v241 = vld [vmem:[#allocation7 + $0x1e0] sm:$0xff]
    %v242 = vld [vmem:[#allocation7 + $0x1e8] sm:$0xff]
    %v243 = vld [vmem:[#allocation7 + $0x1f0] sm:$0xff]
    %v244 = vld [vmem:[#allocation7 + $0x1f8] sm:$0xff]
    %v245 = vld [vmem:[#allocation8] sm:$0xf]
    %v247 = vperm.slane %v245, 0
    %v248 = vperm.slane %v245, 1
    %v249 = vperm.slane %v245, 2
    %v250 = vperm.slane %v245, 3
    %v319 = vunpack.c.l.b16 %v181
    %v320 = vunpack.c.h.b16 %v181
    %v321 = vunpack.c.l.b16 %v182
    %v322 = vunpack.c.h.b16 %v182
    %v323 = vunpack.c.l.b16 %v183
    %v324 = vunpack.c.h.b16 %v183
    %v325 = vunpack.c.l.b16 %v184
    %v326 = vunpack.c.h.b16 %v184
    %v327 = vunpack.c.l.b16 %v185
    %v328 = vunpack.c.h.b16 %v185
    %v329 = vunpack.c.l.b16 %v186
    %v330 = vunpack.c.h.b16 %v186
    %v331 = vunpack.c.l.b16 %v187
    %v332 = vunpack.c.h.b16 %v187
    %v333 = vunpack.c.l.b16 %v188
    %v334 = vunpack.c.h.b16 %v188
    %v335 = vunpack.c.l.b16 %v189
    %v336 = vunpack.c.h.b16 %v189
    %v337 = vunpack.c.l.b16 %v190
    %v338 = vunpack.c.h.b16 %v190
    %v339 = vunpack.c.l.b16 %v191
    %v340 = vunpack.c.h.b16 %v191
    %v341 = vunpack.c.l.b16 %v192
    %v342 = vunpack.c.h.b16 %v192
    %v343 = vunpack.c.l.b16 %v193
    %v344 = vunpack.c.h.b16 %v193
    %v345 = vunpack.c.l.b16 %v194
    %v346 = vunpack.c.h.b16 %v194
    %v347 = vunpack.c.l.b16 %v195
    %v348 = vunpack.c.h.b16 %v195
    %v349 = vunpack.c.l.b16 %v196
    %v350 = vunpack.c.h.b16 %v196
    %v351 = vunpack.c.l.b16 %v197
    %v352 = vunpack.c.h.b16 %v197
    %v353 = vunpack.c.l.b16 %v198
    %v354 = vunpack.c.h.b16 %v198
    %v355 = vunpack.c.l.b16 %v199
    %v356 = vunpack.c.h.b16 %v199
    %v357 = vunpack.c.l.b16 %v200
    %v358 = vunpack.c.h.b16 %v200
    %v359 = vunpack.c.l.b16 %v201
    %v360 = vunpack.c.h.b16 %v201
    %v361 = vunpack.c.l.b16 %v202
    %v362 = vunpack.c.h.b16 %v202
    %v363 = vunpack.c.l.b16 %v203
    %v364 = vunpack.c.h.b16 %v203
    %v365 = vunpack.c.l.b16 %v204
    %v366 = vunpack.c.h.b16 %v204
    %v367 = vunpack.c.l.b16 %v205
    %v368 = vunpack.c.h.b16 %v205
    %v369 = vunpack.c.l.b16 %v206
    %v370 = vunpack.c.h.b16 %v206
    %v371 = vunpack.c.l.b16 %v207
    %v372 = vunpack.c.h.b16 %v207
    %v373 = vunpack.c.l.b16 %v208
    %v374 = vunpack.c.h.b16 %v208
    %v375 = vunpack.c.l.b16 %v209
    %v376 = vunpack.c.h.b16 %v209
    %v377 = vunpack.c.l.b16 %v210
    %v378 = vunpack.c.h.b16 %v210
    %v379 = vunpack.c.l.b16 %v211
    %v380 = vunpack.c.h.b16 %v211
    %v381 = vunpack.c.l.b16 %v212
    %v382 = vunpack.c.h.b16 %v212
    %v383 = vunpack.c.l.b16 %v213
    %v384 = vunpack.c.h.b16 %v213
    %v385 = vunpack.c.l.b16 %v214
    %v386 = vunpack.c.h.b16 %v214
    %v387 = vunpack.c.l.b16 %v215
    %v388 = vunpack.c.h.b16 %v215
    %v389 = vunpack.c.l.b16 %v216
    %v390 = vunpack.c.h.b16 %v216
    %v391 = vunpack.c.l.b16 %v217
    %v392 = vunpack.c.h.b16 %v217
    %v393 = vunpack.c.l.b16 %v218
    %v394 = vunpack.c.h.b16 %v218
    %v395 = vunpack.c.l.b16 %v219
    %v396 = vunpack.c.h.b16 %v219
    %v397 = vunpack.c.l.b16 %v220
    %v398 = vunpack.c.h.b16 %v220
    %v399 = vunpack.c.l.b16 %v221
    %v400 = vunpack.c.h.b16 %v221
    %v401 = vunpack.c.l.b16 %v222
    %v402 = vunpack.c.h.b16 %v222
    %v403 = vunpack.c.l.b16 %v223
    %v404 = vunpack.c.h.b16 %v223
    %v405 = vunpack.c.l.b16 %v224
    %v406 = vunpack.c.h.b16 %v224
    %v407 = vunpack.c.l.b16 %v225
    %v408 = vunpack.c.h.b16 %v225
    %v409 = vunpack.c.l.b16 %v226
    %v410 = vunpack.c.h.b16 %v226
    %v411 = vunpack.c.l.b16 %v227
    %v412 = vunpack.c.h.b16 %v227
    %v413 = vunpack.c.l.b16 %v228
    %v414 = vunpack.c.h.b16 %v228
    %v415 = vunpack.c.l.b16 %v229
    %v416 = vunpack.c.h.b16 %v229
    %v417 = vunpack.c.l.b16 %v230
    %v418 = vunpack.c.h.b16 %v230
    %v419 = vunpack.c.l.b16 %v231
    %v420 = vunpack.c.h.b16 %v231
    %v421 = vunpack.c.l.b16 %v232
    %v422 = vunpack.c.h.b16 %v232
    %v423 = vunpack.c.l.b16 %v233
    %v424 = vunpack.c.h.b16 %v233
    %v425 = vunpack.c.l.b16 %v234
    %v426 = vunpack.c.h.b16 %v234
    %v427 = vunpack.c.l.b16 %v235
    %v428 = vunpack.c.h.b16 %v235
    %v429 = vunpack.c.l.b16 %v236
    %v430 = vunpack.c.h.b16 %v236
    %v431 = vunpack.c.l.b16 %v237
    %v432 = vunpack.c.h.b16 %v237
    %v433 = vunpack.c.l.b16 %v238
    %v434 = vunpack.c.h.b16 %v238
    %v435 = vunpack.c.l.b16 %v239
    %v436 = vunpack.c.h.b16 %v239
    %v437 = vunpack.c.l.b16 %v240
    %v438 = vunpack.c.h.b16 %v240
    %v439 = vunpack.c.l.b16 %v241
    %v440 = vunpack.c.h.b16 %v241
    %v441 = vunpack.c.l.b16 %v242
    %v442 = vunpack.c.h.b16 %v242
    %v443 = vunpack.c.l.b16 %v243
    %v444 = vunpack.c.h.b16 %v243
    %v445 = vunpack.c.l.b16 %v244
    %v446 = vunpack.c.h.b16 %v244
    %v447 = vpack.c.b16 %v323, %v319
    %v448 = vpack.c.b16 %v324, %v320
    %v449 = vpack.c.b16 %v325, %v321
    %v450 = vpack.c.b16 %v326, %v322
    %v451 = vpack.c.b16 %v331, %v327
    %v452 = vpack.c.b16 %v332, %v328
    %v453 = vpack.c.b16 %v333, %v329
    %v454 = vpack.c.b16 %v334, %v330
    %v455 = vpack.c.b16 %v339, %v335
    %v456 = vpack.c.b16 %v340, %v336
    %v457 = vpack.c.b16 %v341, %v337
    %v458 = vpack.c.b16 %v342, %v338
    %v459 = vpack.c.b16 %v347, %v343
    %v460 = vpack.c.b16 %v348, %v344
    %v461 = vpack.c.b16 %v349, %v345
    %v462 = vpack.c.b16 %v350, %v346
    %v463 = vpack.c.b16 %v355, %v351
    %v464 = vpack.c.b16 %v356, %v352
    %v465 = vpack.c.b16 %v357, %v353
    %v466 = vpack.c.b16 %v358, %v354
    %v467 = vpack.c.b16 %v363, %v359
    %v468 = vpack.c.b16 %v364, %v360
    %v469 = vpack.c.b16 %v365, %v361
    %v470 = vpack.c.b16 %v366, %v362
    %v471 = vpack.c.b16 %v371, %v367
    %v472 = vpack.c.b16 %v372, %v368
    %v473 = vpack.c.b16 %v373, %v369
    %v474 = vpack.c.b16 %v374, %v370
    %v475 = vpack.c.b16 %v379, %v375
    %v476 = vpack.c.b16 %v380, %v376
    %v477 = vpack.c.b16 %v381, %v377
    %v478 = vpack.c.b16 %v382, %v378
    %v479 = vpack.c.b16 %v387, %v383
    %v480 = vpack.c.b16 %v388, %v384
    %v481 = vpack.c.b16 %v389, %v385
    %v482 = vpack.c.b16 %v390, %v386
    %v483 = vpack.c.b16 %v395, %v391
    %v484 = vpack.c.b16 %v396, %v392
    %v485 = vpack.c.b16 %v397, %v393
    %v486 = vpack.c.b16 %v398, %v394
    %v487 = vpack.c.b16 %v403, %v399
    %v488 = vpack.c.b16 %v404, %v400
    %v489 = vpack.c.b16 %v405, %v401
    %v490 = vpack.c.b16 %v406, %v402
    %v491 = vpack.c.b16 %v411, %v407
    %v492 = vpack.c.b16 %v412, %v408
    %v493 = vpack.c.b16 %v413, %v409
    %v494 = vpack.c.b16 %v414, %v410
    %v495 = vpack.c.b16 %v419, %v415
    %v496 = vpack.c.b16 %v420, %v416
    %v497 = vpack.c.b16 %v421, %v417
    %v498 = vpack.c.b16 %v422, %v418
    %v499 = vpack.c.b16 %v427, %v423
    %v500 = vpack.c.b16 %v428, %v424
    %v501 = vpack.c.b16 %v429, %v425
    %v502 = vpack.c.b16 %v430, %v426
    %v503 = vpack.c.b16 %v435, %v431
    %v504 = vpack.c.b16 %v436, %v432
    %v505 = vpack.c.b16 %v437, %v433
    %v506 = vpack.c.b16 %v438, %v434
    %v507 = vpack.c.b16 %v443, %v439
    %v508 = vpack.c.b16 %v444, %v440
    %v509 = vpack.c.b16 %v445, %v441
    %v510 = vpack.c.b16 %v446, %v442
    %575 = vmatpush.bf16.msra.mxu0 %v475
    %576 = vmatpush.bf16.msra.mxu0 %v471
    %577 = vmatpush.bf16.msra.mxu0 %v467
    %578 = vmatpush.bf16.msra.mxu0 %v463
    %579 = vmatpush.bf16.msra.mxu0 %v459
    %580 = vmatpush.bf16.msra.mxu0 %v455
    %581 = vmatpush.bf16.msra.mxu0 %v451
    %582 = vmatpush.bf16.msra.mxu0 %v447
    %583 = vmatmul.bf16.gmra.mxu0 %v179
    %v584 = vpop.f32.mrf.mxu0
    %v585 = vadd.f32 %v247, %v584
    %v586 = vpop.f32.mrf.mxu0
    %587 = vdwg.mxu0
    %588 = vmatpush.bf16.msra.mxu0 %v507
    %589 = vmatpush.bf16.msra.mxu0 %v503
    %590 = vmatpush.bf16.msra.mxu0 %v499
    %591 = vmatpush.bf16.msra.mxu0 %v495
    %592 = vmatpush.bf16.msra.mxu0 %v491
    %593 = vmatpush.bf16.msra.mxu0 %v487
    %594 = vmatpush.bf16.msra.mxu0 %v483
    %595 = vmatpush.bf16.msra.mxu0 %v479
    %596 = vmatmul.bf16.gmra.mxu0 %v180
    %v597 = vpop.f32.mrf.mxu0
    %v598 = vadd.f32 %v585, %v597
    %v599 = vpop.f32.mrf.mxu0
    %600 = vdwg.mxu0
    %601 = vmatpush.bf16.msra.mxu0 %v476
    %602 = vmatpush.bf16.msra.mxu0 %v472
    %603 = vmatpush.bf16.msra.mxu0 %v468
    %604 = vmatpush.bf16.msra.mxu0 %v464
    %605 = vmatpush.bf16.msra.mxu0 %v460
    %606 = vmatpush.bf16.msra.mxu0 %v456
    %607 = vmatpush.bf16.msra.mxu0 %v452
    %608 = vmatpush.bf16.msra.mxu0 %v448
    %609 = vmatmul.bf16.gmra.mxu0 %v179
    %v610 = vpop.f32.mrf.mxu0
    %v611 = vadd.f32 %v248, %v610
    %v612 = vpop.f32.mrf.mxu0
    %613 = vdwg.mxu0
    %614 = vmatpush.bf16.msra.mxu0 %v508
    %615 = vmatpush.bf16.msra.mxu0 %v504
    %616 = vmatpush.bf16.msra.mxu0 %v500
    %617 = vmatpush.bf16.msra.mxu0 %v496
    %618 = vmatpush.bf16.msra.mxu0 %v492
    %619 = vmatpush.bf16.msra.mxu0 %v488
    %620 = vmatpush.bf16.msra.mxu0 %v484
    %621 = vmatpush.bf16.msra.mxu0 %v480
    %622 = vmatmul.bf16.gmra.mxu0 %v180
    %v623 = vpop.f32.mrf.mxu0
    %v624 = vadd.f32 %v611, %v623
    %v625 = vpop.f32.mrf.mxu0
    %626 = vdwg.mxu0
    %627 = vmatpush.bf16.msra.mxu0 %v477
    %628 = vmatpush.bf16.msra.mxu0 %v473
    %629 = vmatpush.bf16.msra.mxu0 %v469
    %630 = vmatpush.bf16.msra.mxu0 %v465
    %631 = vmatpush.bf16.msra.mxu0 %v461
    %632 = vmatpush.bf16.msra.mxu0 %v457
    %633 = vmatpush.bf16.msra.mxu0 %v453
    %634 = vmatpush.bf16.msra.mxu0 %v449
    %635 = vmatmul.bf16.gmra.mxu0 %v179
    %v636 = vpop.f32.mrf.mxu0
    %v637 = vadd.f32 %v249, %v636
    %v638 = vpop.f32.mrf.mxu0
    %639 = vdwg.mxu0
    %640 = vmatpush.bf16.msra.mxu0 %v509
    %641 = vmatpush.bf16.msra.mxu0 %v505
    %642 = vmatpush.bf16.msra.mxu0 %v501
    %643 = vmatpush.bf16.msra.mxu0 %v497
    %644 = vmatpush.bf16.msra.mxu0 %v493
    %645 = vmatpush.bf16.msra.mxu0 %v489
    %646 = vmatpush.bf16.msra.mxu0 %v485
    %647 = vmatpush.bf16.msra.mxu0 %v481
    %648 = vmatmul.bf16.gmra.mxu0 %v180
    %v649 = vpop.f32.mrf.mxu0
    %v650 = vadd.f32 %v637, %v649
    %v651 = vpop.f32.mrf.mxu0
    %652 = vdwg.mxu0
    %653 = vmatpush.bf16.msra.mxu0 %v478
    %654 = vmatpush.bf16.msra.mxu0 %v474
    %655 = vmatpush.bf16.msra.mxu0 %v470
    %656 = vmatpush.bf16.msra.mxu0 %v466
    %657 = vmatpush.bf16.msra.mxu0 %v462
    %658 = vmatpush.bf16.msra.mxu0 %v458
    %659 = vmatpush.bf16.msra.mxu0 %v454
    %660 = vmatpush.bf16.msra.mxu0 %v450
    %661 = vmatmul.bf16.gmra.mxu0 %v179
    %v662 = vpop.f32.mrf.mxu0
    %v663 = vadd.f32 %v250, %v662
    %v664 = vpop.f32.mrf.mxu0
    %665 = vdwg.mxu0
    %666 = vmatpush.bf16.msra.mxu0 %v510
    %667 = vmatpush.bf16.msra.mxu0 %v506
    %668 = vmatpush.bf16.msra.mxu0 %v502
    %669 = vmatpush.bf16.msra.mxu0 %v498
    %670 = vmatpush.bf16.msra.mxu0 %v494
    %671 = vmatpush.bf16.msra.mxu0 %v490
    %672 = vmatpush.bf16.msra.mxu0 %v486
    %673 = vmatpush.bf16.msra.mxu0 %v482
    %674 = vmatmul.bf16.gmra.mxu0 %v180
    %v675 = vpop.f32.mrf.mxu0
    %v676 = vadd.f32 %v663, %v675
    %v677 = vpop.f32.mrf.mxu0
    %678 = vdwg.mxu0
    %vm679 = vcmp.gt.f32.partialorder %v598, 0.0
    %vm680 = vcmp.gt.f32.partialorder %v624, 0.0
    %vm681 = vcmp.gt.f32.partialorder %v650, 0.0
    %vm682 = vcmp.gt.f32.partialorder %v676, 0.0
    %v683 = vmul.f32 %v598, 0.2
    %v684 = vmul.f32 %v624, 0.2
    %v685 = vmul.f32 %v650, 0.2
    %v686 = vmul.f32 %v676, 0.2
    %v687 = vsel %vm679, %v598, %v683
    %v688 = vsel %vm680, %v624, %v684
    %v689 = vsel %vm681, %v650, %v685
    %v690 = vsel %vm682, %v676, %v686
    %v691 = vpack.c.bf16 %v687, %v687
    %v692 = vpack.c.bf16 %v688, %v688
    %v693 = vpack.c.bf16 %v689, %v689
    %v694 = vpack.c.bf16 %v690, %v690
    %v695 = vld [vmem:[#allocation10] sm:$0xf]
    %v696 = vld [vmem:[#allocation10 + $0x4] sm:$0xf]
    %v697 = vld [vmem:[#allocation10 + $0x8] sm:$0xf]
    %v698 = vld [vmem:[#allocation10 + $0xc] sm:$0xf]
    %v699 = vld [vmem:[#allocation10 + $0x10] sm:$0xf]
    %v700 = vld [vmem:[#allocation10 + $0x14] sm:$0xf]
    %v701 = vld [vmem:[#allocation10 + $0x18] sm:$0xf]
    %v702 = vld [vmem:[#allocation10 + $0x1c] sm:$0xf]
    %v703 = vld [vmem:[#allocation10 + $0x20] sm:$0xf]
    %v704 = vld [vmem:[#allocation10 + $0x24] sm:$0xf]
    %v705 = vld [vmem:[#allocation10 + $0x28] sm:$0xf]
    %v706 = vld [vmem:[#allocation10 + $0x2c] sm:$0xf]
    %v707 = vld [vmem:[#allocation10 + $0x30] sm:$0xf]
    %v708 = vld [vmem:[#allocation10 + $0x34] sm:$0xf]
    %v709 = vld [vmem:[#allocation10 + $0x38] sm:$0xf]
    %v710 = vld [vmem:[#allocation10 + $0x3c] sm:$0xf]
    %v711 = vld [vmem:[#allocation10 + $0x40] sm:$0xf]
    %v712 = vld [vmem:[#allocation10 + $0x44] sm:$0xf]
    %v713 = vld [vmem:[#allocation10 + $0x48] sm:$0xf]
    %v714 = vld [vmem:[#allocation10 + $0x4c] sm:$0xf]
    %v715 = vld [vmem:[#allocation10 + $0x50] sm:$0xf]
    %v716 = vld [vmem:[#allocation10 + $0x54] sm:$0xf]
    %v717 = vld [vmem:[#allocation10 + $0x58] sm:$0xf]
    %v718 = vld [vmem:[#allocation10 + $0x5c] sm:$0xf]
    %v719 = vld [vmem:[#allocation10 + $0x60] sm:$0xf]
    %v720 = vld [vmem:[#allocation10 + $0x64] sm:$0xf]
    %v721 = vld [vmem:[#allocation10 + $0x68] sm:$0xf]
    %v722 = vld [vmem:[#allocation10 + $0x6c] sm:$0xf]
    %v723 = vld [vmem:[#allocation10 + $0x70] sm:$0xf]
    %v724 = vld [vmem:[#allocation10 + $0x74] sm:$0xf]
    %v725 = vld [vmem:[#allocation10 + $0x78] sm:$0xf]
    %v726 = vld [vmem:[#allocation10 + $0x7c] sm:$0xf]
    %v727 = vld [vmem:[#allocation10 + $0x80] sm:$0xf]
    %v728 = vld [vmem:[#allocation10 + $0x84] sm:$0xf]
    %v729 = vld [vmem:[#allocation10 + $0x88] sm:$0xf]
    %v730 = vld [vmem:[#allocation10 + $0x8c] sm:$0xf]
    %v731 = vld [vmem:[#allocation10 + $0x90] sm:$0xf]
    %v732 = vld [vmem:[#allocation10 + $0x94] sm:$0xf]
    %v733 = vld [vmem:[#allocation10 + $0x98] sm:$0xf]
    %v734 = vld [vmem:[#allocation10 + $0x9c] sm:$0xf]
    %v735 = vld [vmem:[#allocation10 + $0xa0] sm:$0xf]
    %v736 = vld [vmem:[#allocation10 + $0xa4] sm:$0xf]
    %v737 = vld [vmem:[#allocation10 + $0xa8] sm:$0xf]
    %v738 = vld [vmem:[#allocation10 + $0xac] sm:$0xf]
    %v739 = vld [vmem:[#allocation10 + $0xb0] sm:$0xf]
    %v740 = vld [vmem:[#allocation10 + $0xb4] sm:$0xf]
    %v741 = vld [vmem:[#allocation10 + $0xb8] sm:$0xf]
    %v742 = vld [vmem:[#allocation10 + $0xbc] sm:$0xf]
    %v743 = vld [vmem:[#allocation10 + $0xc0] sm:$0xf]
    %v744 = vld [vmem:[#allocation10 + $0xc4] sm:$0xf]
    %v745 = vld [vmem:[#allocation10 + $0xc8] sm:$0xf]
    %v746 = vld [vmem:[#allocation10 + $0xcc] sm:$0xf]
    %v747 = vld [vmem:[#allocation10 + $0xd0] sm:$0xf]
    %v748 = vld [vmem:[#allocation10 + $0xd4] sm:$0xf]
    %v749 = vld [vmem:[#allocation10 + $0xd8] sm:$0xf]
    %v750 = vld [vmem:[#allocation10 + $0xdc] sm:$0xf]
    %v751 = vld [vmem:[#allocation10 + $0xe0] sm:$0xf]
    %v752 = vld [vmem:[#allocation10 + $0xe4] sm:$0xf]
    %v753 = vld [vmem:[#allocation10 + $0xe8] sm:$0xf]
    %v754 = vld [vmem:[#allocation10 + $0xec] sm:$0xf]
    %v755 = vld [vmem:[#allocation10 + $0xf0] sm:$0xf]
    %v756 = vld [vmem:[#allocation10 + $0xf4] sm:$0xf]
    %v757 = vld [vmem:[#allocation10 + $0xf8] sm:$0xf]
    %v758 = vld [vmem:[#allocation10 + $0xfc] sm:$0xf]
    %v759 = vld [vmem:[#allocation11] sm:$0x1]
    %v761 = vperm.slane %v759, 0
    %v827 = vunpack.c.l.b16 %v695
    %v828 = vunpack.c.l.b16 %v696
    %v829 = vunpack.c.l.b16 %v697
    %v830 = vunpack.c.l.b16 %v698
    %v831 = vunpack.c.l.b16 %v699
    %v832 = vunpack.c.l.b16 %v700
    %v833 = vunpack.c.l.b16 %v701
    %v834 = vunpack.c.l.b16 %v702
    %v835 = vunpack.c.l.b16 %v703
    %v836 = vunpack.c.l.b16 %v704
    %v837 = vunpack.c.l.b16 %v705
    %v838 = vunpack.c.l.b16 %v706
    %v839 = vunpack.c.l.b16 %v707
    %v840 = vunpack.c.l.b16 %v708
    %v841 = vunpack.c.l.b16 %v709
    %v842 = vunpack.c.l.b16 %v710
    %v843 = vunpack.c.l.b16 %v711
    %v844 = vunpack.c.l.b16 %v712
    %v845 = vunpack.c.l.b16 %v713
    %v846 = vunpack.c.l.b16 %v714
    %v847 = vunpack.c.l.b16 %v715
    %v848 = vunpack.c.l.b16 %v716
    %v849 = vunpack.c.l.b16 %v717
    %v850 = vunpack.c.l.b16 %v718
    %v851 = vunpack.c.l.b16 %v719
    %v852 = vunpack.c.l.b16 %v720
    %v853 = vunpack.c.l.b16 %v721
    %v854 = vunpack.c.l.b16 %v722
    %v855 = vunpack.c.l.b16 %v723
    %v856 = vunpack.c.l.b16 %v724
    %v857 = vunpack.c.l.b16 %v725
    %v858 = vunpack.c.l.b16 %v726
    %v859 = vunpack.c.l.b16 %v727
    %v860 = vunpack.c.l.b16 %v728
    %v861 = vunpack.c.l.b16 %v729
    %v862 = vunpack.c.l.b16 %v730
    %v863 = vunpack.c.l.b16 %v731
    %v864 = vunpack.c.l.b16 %v732
    %v865 = vunpack.c.l.b16 %v733
    %v866 = vunpack.c.l.b16 %v734
    %v867 = vunpack.c.l.b16 %v735
    %v868 = vunpack.c.l.b16 %v736
    %v869 = vunpack.c.l.b16 %v737
    %v870 = vunpack.c.l.b16 %v738
    %v871 = vunpack.c.l.b16 %v739
    %v872 = vunpack.c.l.b16 %v740
    %v873 = vunpack.c.l.b16 %v741
    %v874 = vunpack.c.l.b16 %v742
    %v875 = vunpack.c.l.b16 %v743
    %v876 = vunpack.c.l.b16 %v744
    %v877 = vunpack.c.l.b16 %v745
    %v878 = vunpack.c.l.b16 %v746
    %v879 = vunpack.c.l.b16 %v747
    %v880 = vunpack.c.l.b16 %v748
    %v881 = vunpack.c.l.b16 %v749
    %v882 = vunpack.c.l.b16 %v750
    %v883 = vunpack.c.l.b16 %v751
    %v884 = vunpack.c.l.b16 %v752
    %v885 = vunpack.c.l.b16 %v753
    %v886 = vunpack.c.l.b16 %v754
    %v887 = vunpack.c.l.b16 %v755
    %v888 = vunpack.c.l.b16 %v756
    %v889 = vunpack.c.l.b16 %v757
    %v890 = vunpack.c.l.b16 %v758
    %v891 = vpack.c.b16 %v828, %v827
    %v892 = vpack.c.b16 %v830, %v829
    %v893 = vpack.c.b16 %v832, %v831
    %v894 = vpack.c.b16 %v834, %v833
    %v895 = vpack.c.b16 %v836, %v835
    %v896 = vpack.c.b16 %v838, %v837
    %v897 = vpack.c.b16 %v840, %v839
    %v898 = vpack.c.b16 %v842, %v841
    %v899 = vpack.c.b16 %v844, %v843
    %v900 = vpack.c.b16 %v846, %v845
    %v901 = vpack.c.b16 %v848, %v847
    %v902 = vpack.c.b16 %v850, %v849
    %v903 = vpack.c.b16 %v852, %v851
    %v904 = vpack.c.b16 %v854, %v853
    %v905 = vpack.c.b16 %v856, %v855
    %v906 = vpack.c.b16 %v858, %v857
    %v907 = vpack.c.b16 %v860, %v859
    %v908 = vpack.c.b16 %v862, %v861
    %v909 = vpack.c.b16 %v864, %v863
    %v910 = vpack.c.b16 %v866, %v865
    %v911 = vpack.c.b16 %v868, %v867
    %v912 = vpack.c.b16 %v870, %v869
    %v913 = vpack.c.b16 %v872, %v871
    %v914 = vpack.c.b16 %v874, %v873
    %v915 = vpack.c.b16 %v876, %v875
    %v916 = vpack.c.b16 %v878, %v877
    %v917 = vpack.c.b16 %v880, %v879
    %v918 = vpack.c.b16 %v882, %v881
    %v919 = vpack.c.b16 %v884, %v883
    %v920 = vpack.c.b16 %v886, %v885
    %v921 = vpack.c.b16 %v888, %v887
    %v922 = vpack.c.b16 %v890, %v889
    %955 = vmatpush.bf16.msra.mxu0 %v898
    %956 = vmatpush.bf16.msra.mxu0 %v897
    %957 = vmatpush.bf16.msra.mxu0 %v896
    %958 = vmatpush.bf16.msra.mxu0 %v895
    %959 = vmatpush.bf16.msra.mxu0 %v894
    %960 = vmatpush.bf16.msra.mxu0 %v893
    %961 = vmatpush.bf16.msra.mxu0 %v892
    %962 = vmatpush.bf16.msra.mxu0 %v891
    %963 = vmatmul.bf16.gmra.mxu0 %v691
    %v964 = vpop.f32.mrf.mxu0
    %v965 = vadd.f32 %v761, %v964
    %v966 = vpop.f32.mrf.mxu0
    %967 = vdwg.mxu0
    %968 = vmatpush.bf16.msra.mxu0 %v906
    %969 = vmatpush.bf16.msra.mxu0 %v905
    %970 = vmatpush.bf16.msra.mxu0 %v904
    %971 = vmatpush.bf16.msra.mxu0 %v903
    %972 = vmatpush.bf16.msra.mxu0 %v902
    %973 = vmatpush.bf16.msra.mxu0 %v901
    %974 = vmatpush.bf16.msra.mxu0 %v900
    %975 = vmatpush.bf16.msra.mxu0 %v899
    %976 = vmatmul.bf16.gmra.mxu0 %v692
    %v977 = vpop.f32.mrf.mxu0
    %v978 = vadd.f32 %v965, %v977
    %v979 = vpop.f32.mrf.mxu0
    %980 = vdwg.mxu0
    %981 = vmatpush.bf16.msra.mxu0 %v914
    %982 = vmatpush.bf16.msra.mxu0 %v913
    %983 = vmatpush.bf16.msra.mxu0 %v912
    %984 = vmatpush.bf16.msra.mxu0 %v911
    %985 = vmatpush.bf16.msra.mxu0 %v910
    %986 = vmatpush.bf16.msra.mxu0 %v909
    %987 = vmatpush.bf16.msra.mxu0 %v908
    %988 = vmatpush.bf16.msra.mxu0 %v907
    %989 = vmatmul.bf16.gmra.mxu0 %v693
    %v990 = vpop.f32.mrf.mxu0
    %v991 = vadd.f32 %v978, %v990
    %v992 = vpop.f32.mrf.mxu0
    %993 = vdwg.mxu0
    %994 = vmatpush.bf16.msra.mxu0 %v922
    %995 = vmatpush.bf16.msra.mxu0 %v921
    %996 = vmatpush.bf16.msra.mxu0 %v920
    %997 = vmatpush.bf16.msra.mxu0 %v919
    %998 = vmatpush.bf16.msra.mxu0 %v918
    %999 = vmatpush.bf16.msra.mxu0 %v917
    %1000 = vmatpush.bf16.msra.mxu0 %v916
    %1001 = vmatpush.bf16.msra.mxu0 %v915
    %1002 = vmatmul.bf16.gmra.mxu0 %v694
    %v1003 = vpop.f32.mrf.mxu0
    %v1004 = vadd.f32 %v991, %v1003
    %v1005 = vpop.f32.mrf.mxu0
    %1006 = vdwg.mxu0
    %1007 = vst [vmem:[#allocation18] sm:$0xff] %v1004
    %v1008 = vlaneseq
    %v1009 = vand.u32 %v1008, 127
    %vm1010 = vcmp.lt.s32.totalorder %v1009, 32
    %v1011 = vsel %vm1010, 1, 0
    %v1012 = vcvt.s32.f32 %v1011
    %v1013 = vmul.f32 %v1012, %v1004
    %v1014 = vld [vmem:[#allocation5] sm:$0xff]
    %v1015 = vmul.f32 %v1004, 0.5
    %v1016 = vmul.f32 %v1015, 1.442695
    %v1017 = vpow.pop %v1016
    %v1018 = vmul.f32 %v1014, %v1017
    %v1019 = vadd.f32 %v1013, %v1018
    %v1020 = vpack.c.bf16 %v1019, %v1019
    %v1021 = vld [vmem:[#allocation13] sm:$0xff]
    %v1022 = vld [vmem:[#allocation13 + $0x8] sm:$0xff]
    %v1023 = vld [vmem:[#allocation13 + $0x10] sm:$0xff]
    %v1024 = vld [vmem:[#allocation13 + $0x18] sm:$0xff]
    %v1025 = vld [vmem:[#allocation13 + $0x20] sm:$0xff]
    %v1026 = vld [vmem:[#allocation13 + $0x28] sm:$0xff]
    %v1027 = vld [vmem:[#allocation13 + $0x30] sm:$0xff]
    %v1028 = vld [vmem:[#allocation13 + $0x38] sm:$0xff]
    %v1029 = vld [vmem:[#allocation13 + $0x40] sm:$0xff]
    %v1030 = vld [vmem:[#allocation13 + $0x48] sm:$0xff]
    %v1031 = vld [vmem:[#allocation13 + $0x50] sm:$0xff]
    %v1032 = vld [vmem:[#allocation13 + $0x58] sm:$0xff]
    %v1033 = vld [vmem:[#allocation13 + $0x60] sm:$0xff]
    %v1034 = vld [vmem:[#allocation13 + $0x68] sm:$0xff]
    %v1035 = vld [vmem:[#allocation13 + $0x70] sm:$0xff]
    %v1036 = vld [vmem:[#allocation13 + $0x78] sm:$0xff]
    %v1037 = vld [vmem:[%s7] sm:$0x3]
    %v1039 = vperm.slane %v1037, 0
    %v1040 = vperm.slane %v1037, 1
    %v1059 = vunpack.c.l.b16 %v1021
    %v1060 = vunpack.c.h.b16 %v1021
    %v1061 = vunpack.c.l.b16 %v1022
    %v1062 = vunpack.c.h.b16 %v1022
    %v1063 = vunpack.c.l.b16 %v1023
    %v1064 = vunpack.c.h.b16 %v1023
    %v1065 = vunpack.c.l.b16 %v1024
    %v1066 = vunpack.c.h.b16 %v1024
    %v1067 = vunpack.c.l.b16 %v1025
    %v1068 = vunpack.c.h.b16 %v1025
    %v1069 = vunpack.c.l.b16 %v1026
    %v1070 = vunpack.c.h.b16 %v1026
    %v1071 = vunpack.c.l.b16 %v1027
    %v1072 = vunpack.c.h.b16 %v1027
    %v1073 = vunpack.c.l.b16 %v1028
    %v1074 = vunpack.c.h.b16 %v1028
    %v1075 = vunpack.c.l.b16 %v1029
    %v1076 = vunpack.c.h.b16 %v1029
    %v1077 = vunpack.c.l.b16 %v1030
    %v1078 = vunpack.c.h.b16 %v1030
    %v1079 = vunpack.c.l.b16 %v1031
    %v1080 = vunpack.c.h.b16 %v1031
    %v1081 = vunpack.c.l.b16 %v1032
    %v1082 = vunpack.c.h.b16 %v1032
    %v1083 = vunpack.c.l.b16 %v1033
    %v1084 = vunpack.c.h.b16 %v1033
    %v1085 = vunpack.c.l.b16 %v1034
    %v1086 = vunpack.c.h.b16 %v1034
    %v1087 = vunpack.c.l.b16 %v1035
    %v1088 = vunpack.c.h.b16 %v1035
    %v1089 = vunpack.c.l.b16 %v1036
    %v1090 = vunpack.c.h.b16 %v1036
    %v1091 = vpack.c.b16 %v1061, %v1059
    %v1092 = vpack.c.b16 %v1062, %v1060
    %v1093 = vpack.c.b16 %v1065, %v1063
    %v1094 = vpack.c.b16 %v1066, %v1064
    %v1095 = vpack.c.b16 %v1069, %v1067
    %v1096 = vpack.c.b16 %v1070, %v1068
    %v1097 = vpack.c.b16 %v1073, %v1071
    %v1098 = vpack.c.b16 %v1074, %v1072
    %v1099 = vpack.c.b16 %v1077, %v1075
    %v1100 = vpack.c.b16 %v1078, %v1076
    %v1101 = vpack.c.b16 %v1081, %v1079
    %v1102 = vpack.c.b16 %v1082, %v1080
    %v1103 = vpack.c.b16 %v1085, %v1083
    %v1104 = vpack.c.b16 %v1086, %v1084
    %v1105 = vpack.c.b16 %v1089, %v1087
    %v1106 = vpack.c.b16 %v1090, %v1088
    %1123 = vmatpush.bf16.msra.mxu0 %v1105
    %1124 = vmatpush.bf16.msra.mxu0 %v1103
    %1125 = vmatpush.bf16.msra.mxu0 %v1101
    %1126 = vmatpush.bf16.msra.mxu0 %v1099
    %1127 = vmatpush.bf16.msra.mxu0 %v1097
    %1128 = vmatpush.bf16.msra.mxu0 %v1095
    %1129 = vmatpush.bf16.msra.mxu0 %v1093
    %1130 = vmatpush.bf16.msra.mxu0 %v1091
    %1131 = vmatmul.bf16.gmra.mxu0 %v1020
    %v1132 = vpop.f32.mrf.mxu0
    %v1133 = vadd.f32 %v1039, %v1132
    %v1134 = vpop.f32.mrf.mxu0
    %1135 = vdwg.mxu0
    %1136 = vmatpush.bf16.msra.mxu0 %v1106
    %1137 = vmatpush.bf16.msra.mxu0 %v1104
    %1138 = vmatpush.bf16.msra.mxu0 %v1102
    %1139 = vmatpush.bf16.msra.mxu0 %v1100
    %1140 = vmatpush.bf16.msra.mxu0 %v1098
    %1141 = vmatpush.bf16.msra.mxu0 %v1096
    %1142 = vmatpush.bf16.msra.mxu0 %v1094
    %1143 = vmatpush.bf16.msra.mxu0 %v1092
    %1144 = vmatmul.bf16.gmra.mxu0 %v1020
    %v1145 = vpop.f32.mrf.mxu0
    %v1146 = vadd.f32 %v1040, %v1145
    %v1147 = vpop.f32.mrf.mxu0
    %1148 = vdwg.mxu0
    %vm1149 = vcmp.gt.f32.partialorder %v1133, 0.0
    %vm1150 = vcmp.gt.f32.partialorder %v1146, 0.0
    %v1151 = vmul.f32 %v1133, 0.2
    %v1152 = vmul.f32 %v1146, 0.2
    %v1153 = vsel %vm1149, %v1133, %v1151
    %v1154 = vsel %vm1150, %v1146, %v1152
    %v1155 = vpack.c.bf16 %v1153, %v1153
    %v1156 = vpack.c.bf16 %v1154, %v1154
    %v1157 = vld [vmem:[#allocation14] sm:$0xff]
    %v1158 = vld [vmem:[#allocation14 + $0x8] sm:$0xff]
    %v1159 = vld [vmem:[#allocation14 + $0x10] sm:$0xff]
    %v1160 = vld [vmem:[#allocation14 + $0x18] sm:$0xff]
    %v1161 = vld [vmem:[#allocation14 + $0x20] sm:$0xff]
    %v1162 = vld [vmem:[#allocation14 + $0x28] sm:$0xff]
    %v1163 = vld [vmem:[#allocation14 + $0x30] sm:$0xff]
    %v1164 = vld [vmem:[#allocation14 + $0x38] sm:$0xff]
    %v1165 = vld [vmem:[#allocation14 + $0x40] sm:$0xff]
    %v1166 = vld [vmem:[#allocation14 + $0x48] sm:$0xff]
    %v1167 = vld [vmem:[#allocation14 + $0x50] sm:$0xff]
    %v1168 = vld [vmem:[#allocation14 + $0x58] sm:$0xff]
    %v1169 = vld [vmem:[#allocation14 + $0x60] sm:$0xff]
    %v1170 = vld [vmem:[#allocation14 + $0x68] sm:$0xff]
    %v1171 = vld [vmem:[#allocation14 + $0x70] sm:$0xff]
    %v1172 = vld [vmem:[#allocation14 + $0x78] sm:$0xff]
    %v1173 = vld [vmem:[#allocation14 + $0x80] sm:$0xff]
    %v1174 = vld [vmem:[#allocation14 + $0x88] sm:$0xff]
    %v1175 = vld [vmem:[#allocation14 + $0x90] sm:$0xff]
    %v1176 = vld [vmem:[#allocation14 + $0x98] sm:$0xff]
    %v1177 = vld [vmem:[#allocation14 + $0xa0] sm:$0xff]
    %v1178 = vld [vmem:[#allocation14 + $0xa8] sm:$0xff]
    %v1179 = vld [vmem:[#allocation14 + $0xb0] sm:$0xff]
    %v1180 = vld [vmem:[#allocation14 + $0xb8] sm:$0xff]
    %v1181 = vld [vmem:[#allocation14 + $0xc0] sm:$0xff]
    %v1182 = vld [vmem:[#allocation14 + $0xc8] sm:$0xff]
    %v1183 = vld [vmem:[#allocation14 + $0xd0] sm:$0xff]
    %v1184 = vld [vmem:[#allocation14 + $0xd8] sm:$0xff]
    %v1185 = vld [vmem:[#allocation14 + $0xe0] sm:$0xff]
    %v1186 = vld [vmem:[#allocation14 + $0xe8] sm:$0xff]
    %v1187 = vld [vmem:[#allocation14 + $0xf0] sm:$0xff]
    %v1188 = vld [vmem:[#allocation14 + $0xf8] sm:$0xff]
    %v1189 = vld [vmem:[#allocation14 + $0x100] sm:$0xff]
    %v1190 = vld [vmem:[#allocation14 + $0x108] sm:$0xff]
    %v1191 = vld [vmem:[#allocation14 + $0x110] sm:$0xff]
    %v1192 = vld [vmem:[#allocation14 + $0x118] sm:$0xff]
    %v1193 = vld [vmem:[#allocation14 + $0x120] sm:$0xff]
    %v1194 = vld [vmem:[#allocation14 + $0x128] sm:$0xff]
    %v1195 = vld [vmem:[#allocation14 + $0x130] sm:$0xff]
    %v1196 = vld [vmem:[#allocation14 + $0x138] sm:$0xff]
    %v1197 = vld [vmem:[#allocation14 + $0x140] sm:$0xff]
    %v1198 = vld [vmem:[#allocation14 + $0x148] sm:$0xff]
    %v1199 = vld [vmem:[#allocation14 + $0x150] sm:$0xff]
    %v1200 = vld [vmem:[#allocation14 + $0x158] sm:$0xff]
    %v1201 = vld [vmem:[#allocation14 + $0x160] sm:$0xff]
    %v1202 = vld [vmem:[#allocation14 + $0x168] sm:$0xff]
    %v1203 = vld [vmem:[#allocation14 + $0x170] sm:$0xff]
    %v1204 = vld [vmem:[#allocation14 + $0x178] sm:$0xff]
    %v1205 = vld [vmem:[#allocation14 + $0x180] sm:$0xff]
    %v1206 = vld [vmem:[#allocation14 + $0x188] sm:$0xff]
    %v1207 = vld [vmem:[#allocation14 + $0x190] sm:$0xff]
    %v1208 = vld [vmem:[#allocation14 + $0x198] sm:$0xff]
    %v1209 = vld [vmem:[#allocation14 + $0x1a0] sm:$0xff]
    %v1210 = vld [vmem:[#allocation14 + $0x1a8] sm:$0xff]
    %v1211 = vld [vmem:[#allocation14 + $0x1b0] sm:$0xff]
    %v1212 = vld [vmem:[#allocation14 + $0x1b8] sm:$0xff]
    %v1213 = vld [vmem:[#allocation14 + $0x1c0] sm:$0xff]
    %v1214 = vld [vmem:[#allocation14 + $0x1c8] sm:$0xff]
    %v1215 = vld [vmem:[#allocation14 + $0x1d0] sm:$0xff]
    %v1216 = vld [vmem:[#allocation14 + $0x1d8] sm:$0xff]
    %v1217 = vld [vmem:[#allocation14 + $0x1e0] sm:$0xff]
    %v1218 = vld [vmem:[#allocation14 + $0x1e8] sm:$0xff]
    %v1219 = vld [vmem:[#allocation14 + $0x1f0] sm:$0xff]
    %v1220 = vld [vmem:[#allocation14 + $0x1f8] sm:$0xff]
    %v1221 = vld [vmem:[%s9] sm:$0xf]
    %v1223 = vperm.slane %v1221, 0
    %v1224 = vperm.slane %v1221, 1
    %v1225 = vperm.slane %v1221, 2
    %v1226 = vperm.slane %v1221, 3
    %v1295 = vunpack.c.l.b16 %v1157
    %v1296 = vunpack.c.h.b16 %v1157
    %v1297 = vunpack.c.l.b16 %v1158
    %v1298 = vunpack.c.h.b16 %v1158
    %v1299 = vunpack.c.l.b16 %v1159
    %v1300 = vunpack.c.h.b16 %v1159
    %v1301 = vunpack.c.l.b16 %v1160
    %v1302 = vunpack.c.h.b16 %v1160
    %v1303 = vunpack.c.l.b16 %v1161
    %v1304 = vunpack.c.h.b16 %v1161
    %v1305 = vunpack.c.l.b16 %v1162
    %v1306 = vunpack.c.h.b16 %v1162
    %v1307 = vunpack.c.l.b16 %v1163
    %v1308 = vunpack.c.h.b16 %v1163
    %v1309 = vunpack.c.l.b16 %v1164
    %v1310 = vunpack.c.h.b16 %v1164
    %v1311 = vunpack.c.l.b16 %v1165
    %v1312 = vunpack.c.h.b16 %v1165
    %v1313 = vunpack.c.l.b16 %v1166
    %v1314 = vunpack.c.h.b16 %v1166
    %v1315 = vunpack.c.l.b16 %v1167
    %v1316 = vunpack.c.h.b16 %v1167
    %v1317 = vunpack.c.l.b16 %v1168
    %v1318 = vunpack.c.h.b16 %v1168
    %v1319 = vunpack.c.l.b16 %v1169
    %v1320 = vunpack.c.h.b16 %v1169
    %v1321 = vunpack.c.l.b16 %v1170
    %v1322 = vunpack.c.h.b16 %v1170
    %v1323 = vunpack.c.l.b16 %v1171
    %v1324 = vunpack.c.h.b16 %v1171
    %v1325 = vunpack.c.l.b16 %v1172
    %v1326 = vunpack.c.h.b16 %v1172
    %v1327 = vunpack.c.l.b16 %v1173
    %v1328 = vunpack.c.h.b16 %v1173
    %v1329 = vunpack.c.l.b16 %v1174
    %v1330 = vunpack.c.h.b16 %v1174
    %v1331 = vunpack.c.l.b16 %v1175
    %v1332 = vunpack.c.h.b16 %v1175
    %v1333 = vunpack.c.l.b16 %v1176
    %v1334 = vunpack.c.h.b16 %v1176
    %v1335 = vunpack.c.l.b16 %v1177
    %v1336 = vunpack.c.h.b16 %v1177
    %v1337 = vunpack.c.l.b16 %v1178
    %v1338 = vunpack.c.h.b16 %v1178
    %v1339 = vunpack.c.l.b16 %v1179
    %v1340 = vunpack.c.h.b16 %v1179
    %v1341 = vunpack.c.l.b16 %v1180
    %v1342 = vunpack.c.h.b16 %v1180
    %v1343 = vunpack.c.l.b16 %v1181
    %v1344 = vunpack.c.h.b16 %v1181
    %v1345 = vunpack.c.l.b16 %v1182
    %v1346 = vunpack.c.h.b16 %v1182
    %v1347 = vunpack.c.l.b16 %v1183
    %v1348 = vunpack.c.h.b16 %v1183
    %v1349 = vunpack.c.l.b16 %v1184
    %v1350 = vunpack.c.h.b16 %v1184
    %v1351 = vunpack.c.l.b16 %v1185
    %v1352 = vunpack.c.h.b16 %v1185
    %v1353 = vunpack.c.l.b16 %v1186
    %v1354 = vunpack.c.h.b16 %v1186
    %v1355 = vunpack.c.l.b16 %v1187
    %v1356 = vunpack.c.h.b16 %v1187
    %v1357 = vunpack.c.l.b16 %v1188
    %v1358 = vunpack.c.h.b16 %v1188
    %v1359 = vunpack.c.l.b16 %v1189
    %v1360 = vunpack.c.h.b16 %v1189
    %v1361 = vunpack.c.l.b16 %v1190
    %v1362 = vunpack.c.h.b16 %v1190
    %v1363 = vunpack.c.l.b16 %v1191
    %v1364 = vunpack.c.h.b16 %v1191
    %v1365 = vunpack.c.l.b16 %v1192
    %v1366 = vunpack.c.h.b16 %v1192
    %v1367 = vunpack.c.l.b16 %v1193
    %v1368 = vunpack.c.h.b16 %v1193
    %v1369 = vunpack.c.l.b16 %v1194
    %v1370 = vunpack.c.h.b16 %v1194
    %v1371 = vunpack.c.l.b16 %v1195
    %v1372 = vunpack.c.h.b16 %v1195
    %v1373 = vunpack.c.l.b16 %v1196
    %v1374 = vunpack.c.h.b16 %v1196
    %v1375 = vunpack.c.l.b16 %v1197
    %v1376 = vunpack.c.h.b16 %v1197
    %v1377 = vunpack.c.l.b16 %v1198
    %v1378 = vunpack.c.h.b16 %v1198
    %v1379 = vunpack.c.l.b16 %v1199
    %v1380 = vunpack.c.h.b16 %v1199
    %v1381 = vunpack.c.l.b16 %v1200
    %v1382 = vunpack.c.h.b16 %v1200
    %v1383 = vunpack.c.l.b16 %v1201
    %v1384 = vunpack.c.h.b16 %v1201
    %v1385 = vunpack.c.l.b16 %v1202
    %v1386 = vunpack.c.h.b16 %v1202
    %v1387 = vunpack.c.l.b16 %v1203
    %v1388 = vunpack.c.h.b16 %v1203
    %v1389 = vunpack.c.l.b16 %v1204
    %v1390 = vunpack.c.h.b16 %v1204
    %v1391 = vunpack.c.l.b16 %v1205
    %v1392 = vunpack.c.h.b16 %v1205
    %v1393 = vunpack.c.l.b16 %v1206
    %v1394 = vunpack.c.h.b16 %v1206
    %v1395 = vunpack.c.l.b16 %v1207
    %v1396 = vunpack.c.h.b16 %v1207
    %v1397 = vunpack.c.l.b16 %v1208
    %v1398 = vunpack.c.h.b16 %v1208
    %v1399 = vunpack.c.l.b16 %v1209
    %v1400 = vunpack.c.h.b16 %v1209
    %v1401 = vunpack.c.l.b16 %v1210
    %v1402 = vunpack.c.h.b16 %v1210
    %v1403 = vunpack.c.l.b16 %v1211
    %v1404 = vunpack.c.h.b16 %v1211
    %v1405 = vunpack.c.l.b16 %v1212
    %v1406 = vunpack.c.h.b16 %v1212
    %v1407 = vunpack.c.l.b16 %v1213
    %v1408 = vunpack.c.h.b16 %v1213
    %v1409 = vunpack.c.l.b16 %v1214
    %v1410 = vunpack.c.h.b16 %v1214
    %v1411 = vunpack.c.l.b16 %v1215
    %v1412 = vunpack.c.h.b16 %v1215
    %v1413 = vunpack.c.l.b16 %v1216
    %v1414 = vunpack.c.h.b16 %v1216
    %v1415 = vunpack.c.l.b16 %v1217
    %v1416 = vunpack.c.h.b16 %v1217
    %v1417 = vunpack.c.l.b16 %v1218
    %v1418 = vunpack.c.h.b16 %v1218
    %v1419 = vunpack.c.l.b16 %v1219
    %v1420 = vunpack.c.h.b16 %v1219
    %v1421 = vunpack.c.l.b16 %v1220
    %v1422 = vunpack.c.h.b16 %v1220
    %v1423 = vpack.c.b16 %v1299, %v1295
    %v1424 = vpack.c.b16 %v1300, %v1296
    %v1425 = vpack.c.b16 %v1301, %v1297
    %v1426 = vpack.c.b16 %v1302, %v1298
    %v1427 = vpack.c.b16 %v1307, %v1303
    %v1428 = vpack.c.b16 %v1308, %v1304
    %v1429 = vpack.c.b16 %v1309, %v1305
    %v1430 = vpack.c.b16 %v1310, %v1306
    %v1431 = vpack.c.b16 %v1315, %v1311
    %v1432 = vpack.c.b16 %v1316, %v1312
    %v1433 = vpack.c.b16 %v1317, %v1313
    %v1434 = vpack.c.b16 %v1318, %v1314
    %v1435 = vpack.c.b16 %v1323, %v1319
    %v1436 = vpack.c.b16 %v1324, %v1320
    %v1437 = vpack.c.b16 %v1325, %v1321
    %v1438 = vpack.c.b16 %v1326, %v1322
    %v1439 = vpack.c.b16 %v1331, %v1327
    %v1440 = vpack.c.b16 %v1332, %v1328
    %v1441 = vpack.c.b16 %v1333, %v1329
    %v1442 = vpack.c.b16 %v1334, %v1330
    %v1443 = vpack.c.b16 %v1339, %v1335
    %v1444 = vpack.c.b16 %v1340, %v1336
    %v1445 = vpack.c.b16 %v1341, %v1337
    %v1446 = vpack.c.b16 %v1342, %v1338
    %v1447 = vpack.c.b16 %v1347, %v1343
    %v1448 = vpack.c.b16 %v1348, %v1344
    %v1449 = vpack.c.b16 %v1349, %v1345
    %v1450 = vpack.c.b16 %v1350, %v1346
    %v1451 = vpack.c.b16 %v1355, %v1351
    %v1452 = vpack.c.b16 %v1356, %v1352
    %v1453 = vpack.c.b16 %v1357, %v1353
    %v1454 = vpack.c.b16 %v1358, %v1354
    %v1455 = vpack.c.b16 %v1363, %v1359
    %v1456 = vpack.c.b16 %v1364, %v1360
    %v1457 = vpack.c.b16 %v1365, %v1361
    %v1458 = vpack.c.b16 %v1366, %v1362
    %v1459 = vpack.c.b16 %v1371, %v1367
    %v1460 = vpack.c.b16 %v1372, %v1368
    %v1461 = vpack.c.b16 %v1373, %v1369
    %v1462 = vpack.c.b16 %v1374, %v1370
    %v1463 = vpack.c.b16 %v1379, %v1375
    %v1464 = vpack.c.b16 %v1380, %v1376
    %v1465 = vpack.c.b16 %v1381, %v1377
    %v1466 = vpack.c.b16 %v1382, %v1378
    %v1467 = vpack.c.b16 %v1387, %v1383
    %v1468 = vpack.c.b16 %v1388, %v1384
    %v1469 = vpack.c.b16 %v1389, %v1385
    %v1470 = vpack.c.b16 %v1390, %v1386
    %v1471 = vpack.c.b16 %v1395, %v1391
    %v1472 = vpack.c.b16 %v1396, %v1392
    %v1473 = vpack.c.b16 %v1397, %v1393
    %v1474 = vpack.c.b16 %v1398, %v1394
    %v1475 = vpack.c.b16 %v1403, %v1399
    %v1476 = vpack.c.b16 %v1404, %v1400
    %v1477 = vpack.c.b16 %v1405, %v1401
    %v1478 = vpack.c.b16 %v1406, %v1402
    %v1479 = vpack.c.b16 %v1411, %v1407
    %v1480 = vpack.c.b16 %v1412, %v1408
    %v1481 = vpack.c.b16 %v1413, %v1409
    %v1482 = vpack.c.b16 %v1414, %v1410
    %v1483 = vpack.c.b16 %v1419, %v1415
    %v1484 = vpack.c.b16 %v1420, %v1416
    %v1485 = vpack.c.b16 %v1421, %v1417
    %v1486 = vpack.c.b16 %v1422, %v1418
    %1551 = vmatpush.bf16.msra.mxu0 %v1451
    %1552 = vmatpush.bf16.msra.mxu0 %v1447
    %1553 = vmatpush.bf16.msra.mxu0 %v1443
    %1554 = vmatpush.bf16.msra.mxu0 %v1439
    %1555 = vmatpush.bf16.msra.mxu0 %v1435
    %1556 = vmatpush.bf16.msra.mxu0 %v1431
    %1557 = vmatpush.bf16.msra.mxu0 %v1427
    %1558 = vmatpush.bf16.msra.mxu0 %v1423
    %1559 = vmatmul.bf16.gmra.mxu0 %v1155
    %v1560 = vpop.f32.mrf.mxu0
    %v1561 = vadd.f32 %v1223, %v1560
    %v1562 = vpop.f32.mrf.mxu0
    %1563 = vdwg.mxu0
    %1564 = vmatpush.bf16.msra.mxu0 %v1483
    %1565 = vmatpush.bf16.msra.mxu0 %v1479
    %1566 = vmatpush.bf16.msra.mxu0 %v1475
    %1567 = vmatpush.bf16.msra.mxu0 %v1471
    %1568 = vmatpush.bf16.msra.mxu0 %v1467
    %1569 = vmatpush.bf16.msra.mxu0 %v1463
    %1570 = vmatpush.bf16.msra.mxu0 %v1459
    %1571 = vmatpush.bf16.msra.mxu0 %v1455
    %1572 = vmatmul.bf16.gmra.mxu0 %v1156
    %v1573 = vpop.f32.mrf.mxu0
    %v1574 = vadd.f32 %v1561, %v1573
    %v1575 = vpop.f32.mrf.mxu0
    %1576 = vdwg.mxu0
    %1577 = vmatpush.bf16.msra.mxu0 %v1452
    %1578 = vmatpush.bf16.msra.mxu0 %v1448
    %1579 = vmatpush.bf16.msra.mxu0 %v1444
    %1580 = vmatpush.bf16.msra.mxu0 %v1440
    %1581 = vmatpush.bf16.msra.mxu0 %v1436
    %1582 = vmatpush.bf16.msra.mxu0 %v1432
    %1583 = vmatpush.bf16.msra.mxu0 %v1428
    %1584 = vmatpush.bf16.msra.mxu0 %v1424
    %1585 = vmatmul.bf16.gmra.mxu0 %v1155
    %v1586 = vpop.f32.mrf.mxu0
    %v1587 = vadd.f32 %v1224, %v1586
    %v1588 = vpop.f32.mrf.mxu0
    %1589 = vdwg.mxu0
    %1590 = vmatpush.bf16.msra.mxu0 %v1484
    %1591 = vmatpush.bf16.msra.mxu0 %v1480
    %1592 = vmatpush.bf16.msra.mxu0 %v1476
    %1593 = vmatpush.bf16.msra.mxu0 %v1472
    %1594 = vmatpush.bf16.msra.mxu0 %v1468
    %1595 = vmatpush.bf16.msra.mxu0 %v1464
    %1596 = vmatpush.bf16.msra.mxu0 %v1460
    %1597 = vmatpush.bf16.msra.mxu0 %v1456
    %1598 = vmatmul.bf16.gmra.mxu0 %v1156
    %v1599 = vpop.f32.mrf.mxu0
    %v1600 = vadd.f32 %v1587, %v1599
    %v1601 = vpop.f32.mrf.mxu0
    %1602 = vdwg.mxu0
    %1603 = vmatpush.bf16.msra.mxu0 %v1453
    %1604 = vmatpush.bf16.msra.mxu0 %v1449
    %1605 = vmatpush.bf16.msra.mxu0 %v1445
    %1606 = vmatpush.bf16.msra.mxu0 %v1441
    %1607 = vmatpush.bf16.msra.mxu0 %v1437
    %1608 = vmatpush.bf16.msra.mxu0 %v1433
    %1609 = vmatpush.bf16.msra.mxu0 %v1429
    %1610 = vmatpush.bf16.msra.mxu0 %v1425
    %1611 = vmatmul.bf16.gmra.mxu0 %v1155
    %v1612 = vpop.f32.mrf.mxu0
    %v1613 = vadd.f32 %v1225, %v1612
    %v1614 = vpop.f32.mrf.mxu0
    %1615 = vdwg.mxu0
    %1616 = vmatpush.bf16.msra.mxu0 %v1485
    %1617 = vmatpush.bf16.msra.mxu0 %v1481
    %1618 = vmatpush.bf16.msra.mxu0 %v1477
    %1619 = vmatpush.bf16.msra.mxu0 %v1473
    %1620 = vmatpush.bf16.msra.mxu0 %v1469
    %1621 = vmatpush.bf16.msra.mxu0 %v1465
    %1622 = vmatpush.bf16.msra.mxu0 %v1461
    %1623 = vmatpush.bf16.msra.mxu0 %v1457
    %1624 = vmatmul.bf16.gmra.mxu0 %v1156
    %v1625 = vpop.f32.mrf.mxu0
    %v1626 = vadd.f32 %v1613, %v1625
    %v1627 = vpop.f32.mrf.mxu0
    %1628 = vdwg.mxu0
    %1629 = vmatpush.bf16.msra.mxu0 %v1454
    %1630 = vmatpush.bf16.msra.mxu0 %v1450
    %1631 = vmatpush.bf16.msra.mxu0 %v1446
    %1632 = vmatpush.bf16.msra.mxu0 %v1442
    %1633 = vmatpush.bf16.msra.mxu0 %v1438
    %1634 = vmatpush.bf16.msra.mxu0 %v1434
    %1635 = vmatpush.bf16.msra.mxu0 %v1430
    %1636 = vmatpush.bf16.msra.mxu0 %v1426
    %1637 = vmatmul.bf16.gmra.mxu0 %v1155
    %v1638 = vpop.f32.mrf.mxu0
    %v1639 = vadd.f32 %v1226, %v1638
    %v1640 = vpop.f32.mrf.mxu0
    %1641 = vdwg.mxu0
    %1642 = vmatpush.bf16.msra.mxu0 %v1486
    %1643 = vmatpush.bf16.msra.mxu0 %v1482
    %1644 = vmatpush.bf16.msra.mxu0 %v1478
    %1645 = vmatpush.bf16.msra.mxu0 %v1474
    %1646 = vmatpush.bf16.msra.mxu0 %v1470
    %1647 = vmatpush.bf16.msra.mxu0 %v1466
    %1648 = vmatpush.bf16.msra.mxu0 %v1462
    %1649 = vmatpush.bf16.msra.mxu0 %v1458
    %1650 = vmatmul.bf16.gmra.mxu0 %v1156
    %v1651 = vpop.f32.mrf.mxu0
    %v1652 = vadd.f32 %v1639, %v1651
    %v1653 = vpop.f32.mrf.mxu0
    %1654 = vdwg.mxu0
    %vm1655 = vcmp.gt.f32.partialorder %v1574, 0.0
    %vm1656 = vcmp.gt.f32.partialorder %v1600, 0.0
    %vm1657 = vcmp.gt.f32.partialorder %v1626, 0.0
    %vm1658 = vcmp.gt.f32.partialorder %v1652, 0.0
    %v1659 = vmul.f32 %v1574, 0.2
    %v1660 = vmul.f32 %v1600, 0.2
    %v1661 = vmul.f32 %v1626, 0.2
    %v1662 = vmul.f32 %v1652, 0.2
    %v1663 = vsel %vm1655, %v1574, %v1659
    %v1664 = vsel %vm1656, %v1600, %v1660
    %v1665 = vsel %vm1657, %v1626, %v1661
    %v1666 = vsel %vm1658, %v1652, %v1662
    %v1667 = vpack.c.bf16 %v1663, %v1663
    %v1668 = vpack.c.bf16 %v1664, %v1664
    %v1669 = vpack.c.bf16 %v1665, %v1665
    %v1670 = vpack.c.bf16 %v1666, %v1666
    %v1671 = vld [vmem:[#allocation16] sm:$0xff]
    %v1672 = vld [vmem:[#allocation16 + $0x8] sm:$0xff]
    %v1673 = vld [vmem:[#allocation16 + $0x10] sm:$0xff]
    %v1674 = vld [vmem:[#allocation16 + $0x18] sm:$0xff]
    %v1675 = vld [vmem:[#allocation16 + $0x20] sm:$0xff]
    %v1676 = vld [vmem:[#allocation16 + $0x28] sm:$0xff]
    %v1677 = vld [vmem:[#allocation16 + $0x30] sm:$0xff]
    %v1678 = vld [vmem:[#allocation16 + $0x38] sm:$0xff]
    %v1679 = vld [vmem:[#allocation16 + $0x40] sm:$0xff]
    %v1680 = vld [vmem:[#allocation16 + $0x48] sm:$0xff]
    %v1681 = vld [vmem:[#allocation16 + $0x50] sm:$0xff]
    %v1682 = vld [vmem:[#allocation16 + $0x58] sm:$0xff]
    %v1683 = vld [vmem:[#allocation16 + $0x60] sm:$0xff]
    %v1684 = vld [vmem:[#allocation16 + $0x68] sm:$0xff]
    %v1685 = vld [vmem:[#allocation16 + $0x70] sm:$0xff]
    %v1686 = vld [vmem:[#allocation16 + $0x78] sm:$0xff]
    %v1687 = vld [vmem:[#allocation16 + $0x80] sm:$0xff]
    %v1688 = vld [vmem:[#allocation16 + $0x88] sm:$0xff]
    %v1689 = vld [vmem:[#allocation16 + $0x90] sm:$0xff]
    %v1690 = vld [vmem:[#allocation16 + $0x98] sm:$0xff]
    %v1691 = vld [vmem:[#allocation16 + $0xa0] sm:$0xff]
    %v1692 = vld [vmem:[#allocation16 + $0xa8] sm:$0xff]
    %v1693 = vld [vmem:[#allocation16 + $0xb0] sm:$0xff]
    %v1694 = vld [vmem:[#allocation16 + $0xb8] sm:$0xff]
    %v1695 = vld [vmem:[#allocation16 + $0xc0] sm:$0xff]
    %v1696 = vld [vmem:[#allocation16 + $0xc8] sm:$0xff]
    %v1697 = vld [vmem:[#allocation16 + $0xd0] sm:$0xff]
    %v1698 = vld [vmem:[#allocation16 + $0xd8] sm:$0xff]
    %v1699 = vld [vmem:[#allocation16 + $0xe0] sm:$0xff]
    %v1700 = vld [vmem:[#allocation16 + $0xe8] sm:$0xff]
    %v1701 = vld [vmem:[#allocation16 + $0xf0] sm:$0xff]
    %v1702 = vld [vmem:[#allocation16 + $0xf8] sm:$0xff]
    %v1703 = vld [vmem:[#allocation16 + $0x100] sm:$0xff]
    %v1704 = vld [vmem:[#allocation16 + $0x108] sm:$0xff]
    %v1705 = vld [vmem:[#allocation16 + $0x110] sm:$0xff]
    %v1706 = vld [vmem:[#allocation16 + $0x118] sm:$0xff]
    %v1707 = vld [vmem:[#allocation16 + $0x120] sm:$0xff]
    %v1708 = vld [vmem:[#allocation16 + $0x128] sm:$0xff]
    %v1709 = vld [vmem:[#allocation16 + $0x130] sm:$0xff]
    %v1710 = vld [vmem:[#allocation16 + $0x138] sm:$0xff]
    %v1711 = vld [vmem:[#allocation16 + $0x140] sm:$0xff]
    %v1712 = vld [vmem:[#allocation16 + $0x148] sm:$0xff]
    %v1713 = vld [vmem:[#allocation16 + $0x150] sm:$0xff]
    %v1714 = vld [vmem:[#allocation16 + $0x158] sm:$0xff]
    %v1715 = vld [vmem:[#allocation16 + $0x160] sm:$0xff]
    %v1716 = vld [vmem:[#allocation16 + $0x168] sm:$0xff]
    %v1717 = vld [vmem:[#allocation16 + $0x170] sm:$0xff]
    %v1718 = vld [vmem:[#allocation16 + $0x178] sm:$0xff]
    %v1719 = vld [vmem:[#allocation16 + $0x180] sm:$0xff]
    %v1720 = vld [vmem:[#allocation16 + $0x188] sm:$0xff]
    %v1721 = vld [vmem:[#allocation16 + $0x190] sm:$0xff]
    %v1722 = vld [vmem:[#allocation16 + $0x198] sm:$0xff]
    %v1723 = vld [vmem:[#allocation16 + $0x1a0] sm:$0xff]
    %v1724 = vld [vmem:[#allocation16 + $0x1a8] sm:$0xff]
    %v1725 = vld [vmem:[#allocation16 + $0x1b0] sm:$0xff]
    %v1726 = vld [vmem:[#allocation16 + $0x1b8] sm:$0xff]
    %v1727 = vld [vmem:[#allocation16 + $0x1c0] sm:$0xff]
    %v1728 = vld [vmem:[#allocation16 + $0x1c8] sm:$0xff]
    %v1729 = vld [vmem:[#allocation16 + $0x1d0] sm:$0xff]
    %v1730 = vld [vmem:[#allocation16 + $0x1d8] sm:$0xff]
    %v1731 = vld [vmem:[#allocation16 + $0x1e0] sm:$0xff]
    %v1732 = vld [vmem:[#allocation16 + $0x1e8] sm:$0xff]
    %v1733 = vld [vmem:[#allocation16 + $0x1f0] sm:$0xff]
    %v1734 = vld [vmem:[#allocation16 + $0x1f8] sm:$0xff]
    %v1735 = vld [vmem:[%s11] sm:$0x3]
    %v1737 = vperm.slane %v1735, 0
    %v1738 = vperm.slane %v1735, 1
    %v1805 = vunpack.c.l.b16 %v1671
    %v1806 = vunpack.c.h.b16 %v1671
    %v1807 = vunpack.c.l.b16 %v1672
    %v1808 = vunpack.c.h.b16 %v1672
    %v1809 = vunpack.c.l.b16 %v1673
    %v1810 = vunpack.c.h.b16 %v1673
    %v1811 = vunpack.c.l.b16 %v1674
    %v1812 = vunpack.c.h.b16 %v1674
    %v1813 = vunpack.c.l.b16 %v1675
    %v1814 = vunpack.c.h.b16 %v1675
    %v1815 = vunpack.c.l.b16 %v1676
    %v1816 = vunpack.c.h.b16 %v1676
    %v1817 = vunpack.c.l.b16 %v1677
    %v1818 = vunpack.c.h.b16 %v1677
    %v1819 = vunpack.c.l.b16 %v1678
    %v1820 = vunpack.c.h.b16 %v1678
    %v1821 = vunpack.c.l.b16 %v1679
    %v1822 = vunpack.c.h.b16 %v1679
    %v1823 = vunpack.c.l.b16 %v1680
    %v1824 = vunpack.c.h.b16 %v1680
    %v1825 = vunpack.c.l.b16 %v1681
    %v1826 = vunpack.c.h.b16 %v1681
    %v1827 = vunpack.c.l.b16 %v1682
    %v1828 = vunpack.c.h.b16 %v1682
    %v1829 = vunpack.c.l.b16 %v1683
    %v1830 = vunpack.c.h.b16 %v1683
    %v1831 = vunpack.c.l.b16 %v1684
    %v1832 = vunpack.c.h.b16 %v1684
    %v1833 = vunpack.c.l.b16 %v1685
    %v1834 = vunpack.c.h.b16 %v1685
    %v1835 = vunpack.c.l.b16 %v1686
    %v1836 = vunpack.c.h.b16 %v1686
    %v1837 = vunpack.c.l.b16 %v1687
    %v1838 = vunpack.c.h.b16 %v1687
    %v1839 = vunpack.c.l.b16 %v1688
    %v1840 = vunpack.c.h.b16 %v1688
    %v1841 = vunpack.c.l.b16 %v1689
    %v1842 = vunpack.c.h.b16 %v1689
    %v1843 = vunpack.c.l.b16 %v1690
    %v1844 = vunpack.c.h.b16 %v1690
    %v1845 = vunpack.c.l.b16 %v1691
    %v1846 = vunpack.c.h.b16 %v1691
    %v1847 = vunpack.c.l.b16 %v1692
    %v1848 = vunpack.c.h.b16 %v1692
    %v1849 = vunpack.c.l.b16 %v1693
    %v1850 = vunpack.c.h.b16 %v1693
    %v1851 = vunpack.c.l.b16 %v1694
    %v1852 = vunpack.c.h.b16 %v1694
    %v1853 = vunpack.c.l.b16 %v1695
    %v1854 = vunpack.c.h.b16 %v1695
    %v1855 = vunpack.c.l.b16 %v1696
    %v1856 = vunpack.c.h.b16 %v1696
    %v1857 = vunpack.c.l.b16 %v1697
    %v1858 = vunpack.c.h.b16 %v1697
    %v1859 = vunpack.c.l.b16 %v1698
    %v1860 = vunpack.c.h.b16 %v1698
    %v1861 = vunpack.c.l.b16 %v1699
    %v1862 = vunpack.c.h.b16 %v1699
    %v1863 = vunpack.c.l.b16 %v1700
    %v1864 = vunpack.c.h.b16 %v1700
    %v1865 = vunpack.c.l.b16 %v1701
    %v1866 = vunpack.c.h.b16 %v1701
    %v1867 = vunpack.c.l.b16 %v1702
    %v1868 = vunpack.c.h.b16 %v1702
    %v1869 = vunpack.c.l.b16 %v1703
    %v1870 = vunpack.c.h.b16 %v1703
    %v1871 = vunpack.c.l.b16 %v1704
    %v1872 = vunpack.c.h.b16 %v1704
    %v1873 = vunpack.c.l.b16 %v1705
    %v1874 = vunpack.c.h.b16 %v1705
    %v1875 = vunpack.c.l.b16 %v1706
    %v1876 = vunpack.c.h.b16 %v1706
    %v1877 = vunpack.c.l.b16 %v1707
    %v1878 = vunpack.c.h.b16 %v1707
    %v1879 = vunpack.c.l.b16 %v1708
    %v1880 = vunpack.c.h.b16 %v1708
    %v1881 = vunpack.c.l.b16 %v1709
    %v1882 = vunpack.c.h.b16 %v1709
    %v1883 = vunpack.c.l.b16 %v1710
    %v1884 = vunpack.c.h.b16 %v1710
    %v1885 = vunpack.c.l.b16 %v1711
    %v1886 = vunpack.c.h.b16 %v1711
    %v1887 = vunpack.c.l.b16 %v1712
    %v1888 = vunpack.c.h.b16 %v1712
    %v1889 = vunpack.c.l.b16 %v1713
    %v1890 = vunpack.c.h.b16 %v1713
    %v1891 = vunpack.c.l.b16 %v1714
    %v1892 = vunpack.c.h.b16 %v1714
    %v1893 = vunpack.c.l.b16 %v1715
    %v1894 = vunpack.c.h.b16 %v1715
    %v1895 = vunpack.c.l.b16 %v1716
    %v1896 = vunpack.c.h.b16 %v1716
    %v1897 = vunpack.c.l.b16 %v1717
    %v1898 = vunpack.c.h.b16 %v1717
    %v1899 = vunpack.c.l.b16 %v1718
    %v1900 = vunpack.c.h.b16 %v1718
    %v1901 = vunpack.c.l.b16 %v1719
    %v1902 = vunpack.c.h.b16 %v1719
    %v1903 = vunpack.c.l.b16 %v1720
    %v1904 = vunpack.c.h.b16 %v1720
    %v1905 = vunpack.c.l.b16 %v1721
    %v1906 = vunpack.c.h.b16 %v1721
    %v1907 = vunpack.c.l.b16 %v1722
    %v1908 = vunpack.c.h.b16 %v1722
    %v1909 = vunpack.c.l.b16 %v1723
    %v1910 = vunpack.c.h.b16 %v1723
    %v1911 = vunpack.c.l.b16 %v1724
    %v1912 = vunpack.c.h.b16 %v1724
    %v1913 = vunpack.c.l.b16 %v1725
    %v1914 = vunpack.c.h.b16 %v1725
    %v1915 = vunpack.c.l.b16 %v1726
    %v1916 = vunpack.c.h.b16 %v1726
    %v1917 = vunpack.c.l.b16 %v1727
    %v1918 = vunpack.c.h.b16 %v1727
    %v1919 = vunpack.c.l.b16 %v1728
    %v1920 = vunpack.c.h.b16 %v1728
    %v1921 = vunpack.c.l.b16 %v1729
    %v1922 = vunpack.c.h.b16 %v1729
    %v1923 = vunpack.c.l.b16 %v1730
    %v1924 = vunpack.c.h.b16 %v1730
    %v1925 = vunpack.c.l.b16 %v1731
    %v1926 = vunpack.c.h.b16 %v1731
    %v1927 = vunpack.c.l.b16 %v1732
    %v1928 = vunpack.c.h.b16 %v1732
    %v1929 = vunpack.c.l.b16 %v1733
    %v1930 = vunpack.c.h.b16 %v1733
    %v1931 = vunpack.c.l.b16 %v1734
    %v1932 = vunpack.c.h.b16 %v1734
    %v1933 = vpack.c.b16 %v1807, %v1805
    %v1934 = vpack.c.b16 %v1808, %v1806
    %v1935 = vpack.c.b16 %v1811, %v1809
    %v1936 = vpack.c.b16 %v1812, %v1810
    %v1937 = vpack.c.b16 %v1815, %v1813
    %v1938 = vpack.c.b16 %v1816, %v1814
    %v1939 = vpack.c.b16 %v1819, %v1817
    %v1940 = vpack.c.b16 %v1820, %v1818
    %v1941 = vpack.c.b16 %v1823, %v1821
    %v1942 = vpack.c.b16 %v1824, %v1822
    %v1943 = vpack.c.b16 %v1827, %v1825
    %v1944 = vpack.c.b16 %v1828, %v1826
    %v1945 = vpack.c.b16 %v1831, %v1829
    %v1946 = vpack.c.b16 %v1832, %v1830
    %v1947 = vpack.c.b16 %v1835, %v1833
    %v1948 = vpack.c.b16 %v1836, %v1834
    %v1949 = vpack.c.b16 %v1839, %v1837
    %v1950 = vpack.c.b16 %v1840, %v1838
    %v1951 = vpack.c.b16 %v1843, %v1841
    %v1952 = vpack.c.b16 %v1844, %v1842
    %v1953 = vpack.c.b16 %v1847, %v1845
    %v1954 = vpack.c.b16 %v1848, %v1846
    %v1955 = vpack.c.b16 %v1851, %v1849
    %v1956 = vpack.c.b16 %v1852, %v1850
    %v1957 = vpack.c.b16 %v1855, %v1853
    %v1958 = vpack.c.b16 %v1856, %v1854
    %v1959 = vpack.c.b16 %v1859, %v1857
    %v1960 = vpack.c.b16 %v1860, %v1858
    %v1961 = vpack.c.b16 %v1863, %v1861
    %v1962 = vpack.c.b16 %v1864, %v1862
    %v1963 = vpack.c.b16 %v1867, %v1865
    %v1964 = vpack.c.b16 %v1868, %v1866
    %v1965 = vpack.c.b16 %v1871, %v1869
    %v1966 = vpack.c.b16 %v1872, %v1870
    %v1967 = vpack.c.b16 %v1875, %v1873
    %v1968 = vpack.c.b16 %v1876, %v1874
    %v1969 = vpack.c.b16 %v1879, %v1877
    %v1970 = vpack.c.b16 %v1880, %v1878
    %v1971 = vpack.c.b16 %v1883, %v1881
    %v1972 = vpack.c.b16 %v1884, %v1882
    %v1973 = vpack.c.b16 %v1887, %v1885
    %v1974 = vpack.c.b16 %v1888, %v1886
    %v1975 = vpack.c.b16 %v1891, %v1889
    %v1976 = vpack.c.b16 %v1892, %v1890
    %v1977 = vpack.c.b16 %v1895, %v1893
    %v1978 = vpack.c.b16 %v1896, %v1894
    %v1979 = vpack.c.b16 %v1899, %v1897
    %v1980 = vpack.c.b16 %v1900, %v1898
    %v1981 = vpack.c.b16 %v1903, %v1901
    %v1982 = vpack.c.b16 %v1904, %v1902
    %v1983 = vpack.c.b16 %v1907, %v1905
    %v1984 = vpack.c.b16 %v1908, %v1906
    %v1985 = vpack.c.b16 %v1911, %v1909
    %v1986 = vpack.c.b16 %v1912, %v1910
    %v1987 = vpack.c.b16 %v1915, %v1913
    %v1988 = vpack.c.b16 %v1916, %v1914
    %v1989 = vpack.c.b16 %v1919, %v1917
    %v1990 = vpack.c.b16 %v1920, %v1918
    %v1991 = vpack.c.b16 %v1923, %v1921
    %v1992 = vpack.c.b16 %v1924, %v1922
    %v1993 = vpack.c.b16 %v1927, %v1925
    %v1994 = vpack.c.b16 %v1928, %v1926
    %v1995 = vpack.c.b16 %v1931, %v1929
    %v1996 = vpack.c.b16 %v1932, %v1930
    %2061 = vmatpush.bf16.msra.mxu0 %v1947
    %2062 = vmatpush.bf16.msra.mxu0 %v1945
    %2063 = vmatpush.bf16.msra.mxu0 %v1943
    %2064 = vmatpush.bf16.msra.mxu0 %v1941
    %2065 = vmatpush.bf16.msra.mxu0 %v1939
    %2066 = vmatpush.bf16.msra.mxu0 %v1937
    %2067 = vmatpush.bf16.msra.mxu0 %v1935
    %2068 = vmatpush.bf16.msra.mxu0 %v1933
    %2069 = vmatmul.bf16.gmra.mxu0 %v1667
    %v2070 = vpop.f32.mrf.mxu0
    %v2071 = vadd.f32 %v1737, %v2070
    %v2072 = vpop.f32.mrf.mxu0
    %2073 = vdwg.mxu0
    %2074 = vmatpush.bf16.msra.mxu0 %v1963
    %2075 = vmatpush.bf16.msra.mxu0 %v1961
    %2076 = vmatpush.bf16.msra.mxu0 %v1959
    %2077 = vmatpush.bf16.msra.mxu0 %v1957
    %2078 = vmatpush.bf16.msra.mxu0 %v1955
    %2079 = vmatpush.bf16.msra.mxu0 %v1953
    %2080 = vmatpush.bf16.msra.mxu0 %v1951
    %2081 = vmatpush.bf16.msra.mxu0 %v1949
    %2082 = vmatmul.bf16.gmra.mxu0 %v1668
    %v2083 = vpop.f32.mrf.mxu0
    %v2084 = vadd.f32 %v2071, %v2083
    %v2085 = vpop.f32.mrf.mxu0
    %2086 = vdwg.mxu0
    %2087 = vmatpush.bf16.msra.mxu0 %v1979
    %2088 = vmatpush.bf16.msra.mxu0 %v1977
    %2089 = vmatpush.bf16.msra.mxu0 %v1975
    %2090 = vmatpush.bf16.msra.mxu0 %v1973
    %2091 = vmatpush.bf16.msra.mxu0 %v1971
    %2092 = vmatpush.bf16.msra.mxu0 %v1969
    %2093 = vmatpush.bf16.msra.mxu0 %v1967
    %2094 = vmatpush.bf16.msra.mxu0 %v1965
    %2095 = vmatmul.bf16.gmra.mxu0 %v1669
    %v2096 = vpop.f32.mrf.mxu0
    %v2097 = vadd.f32 %v2084, %v2096
    %v2098 = vpop.f32.mrf.mxu0
    %2099 = vdwg.mxu0
    %2100 = vmatpush.bf16.msra.mxu0 %v1995
    %2101 = vmatpush.bf16.msra.mxu0 %v1993
    %2102 = vmatpush.bf16.msra.mxu0 %v1991
    %2103 = vmatpush.bf16.msra.mxu0 %v1989
    %2104 = vmatpush.bf16.msra.mxu0 %v1987
    %2105 = vmatpush.bf16.msra.mxu0 %v1985
    %2106 = vmatpush.bf16.msra.mxu0 %v1983
    %2107 = vmatpush.bf16.msra.mxu0 %v1981
    %2108 = vmatmul.bf16.gmra.mxu0 %v1670
    %v2109 = vpop.f32.mrf.mxu0
    %v2110 = vadd.f32 %v2097, %v2109
    %v2111 = vpop.f32.mrf.mxu0
    %2112 = vdwg.mxu0
    %2113 = vmatpush.bf16.msra.mxu0 %v1948
    %2114 = vmatpush.bf16.msra.mxu0 %v1946
    %2115 = vmatpush.bf16.msra.mxu0 %v1944
    %2116 = vmatpush.bf16.msra.mxu0 %v1942
    %2117 = vmatpush.bf16.msra.mxu0 %v1940
    %2118 = vmatpush.bf16.msra.mxu0 %v1938
    %2119 = vmatpush.bf16.msra.mxu0 %v1936
    %2120 = vmatpush.bf16.msra.mxu0 %v1934
    %2121 = vmatmul.bf16.gmra.mxu0 %v1667
    %v2122 = vpop.f32.mrf.mxu0
    %v2123 = vadd.f32 %v1738, %v2122
    %v2124 = vpop.f32.mrf.mxu0
    %2125 = vdwg.mxu0
    %2126 = vmatpush.bf16.msra.mxu0 %v1964
    %2127 = vmatpush.bf16.msra.mxu0 %v1962
    %2128 = vmatpush.bf16.msra.mxu0 %v1960
    %2129 = vmatpush.bf16.msra.mxu0 %v1958
    %2130 = vmatpush.bf16.msra.mxu0 %v1956
    %2131 = vmatpush.bf16.msra.mxu0 %v1954
    %2132 = vmatpush.bf16.msra.mxu0 %v1952
    %2133 = vmatpush.bf16.msra.mxu0 %v1950
    %2134 = vmatmul.bf16.gmra.mxu0 %v1668
    %v2135 = vpop.f32.mrf.mxu0
    %v2136 = vadd.f32 %v2123, %v2135
    %v2137 = vpop.f32.mrf.mxu0
    %2138 = vdwg.mxu0
    %2139 = vmatpush.bf16.msra.mxu0 %v1980
    %2140 = vmatpush.bf16.msra.mxu0 %v1978
    %2141 = vmatpush.bf16.msra.mxu0 %v1976
    %2142 = vmatpush.bf16.msra.mxu0 %v1974
    %2143 = vmatpush.bf16.msra.mxu0 %v1972
    %2144 = vmatpush.bf16.msra.mxu0 %v1970
    %2145 = vmatpush.bf16.msra.mxu0 %v1968
    %2146 = vmatpush.bf16.msra.mxu0 %v1966
    %2147 = vmatmul.bf16.gmra.mxu0 %v1669
    %v2148 = vpop.f32.mrf.mxu0
    %v2149 = vadd.f32 %v2136, %v2148
    %v2150 = vpop.f32.mrf.mxu0
    %2151 = vdwg.mxu0
    %2152 = vmatpush.bf16.msra.mxu0 %v1996
    %2153 = vmatpush.bf16.msra.mxu0 %v1994
    %2154 = vmatpush.bf16.msra.mxu0 %v1992
    %2155 = vmatpush.bf16.msra.mxu0 %v1990
    %2156 = vmatpush.bf16.msra.mxu0 %v1988
    %2157 = vmatpush.bf16.msra.mxu0 %v1986
    %2158 = vmatpush.bf16.msra.mxu0 %v1984
    %2159 = vmatpush.bf16.msra.mxu0 %v1982
    %2160 = vmatmul.bf16.gmra.mxu0 %v1670
    %v2161 = vpop.f32.mrf.mxu0
    %v2162 = vadd.f32 %v2149, %v2161
    %v2163 = vpop.f32.mrf.mxu0
    %2164 = vdwg.mxu0
    %v2165 = vxor.u32 %v2110, 2147483648
    %v2166 = vxor.u32 %v2162, 2147483648
    %v2167 = vmul.f32 %v2165, 1.442695
    %v2168 = vpow.pop %v2167
    %v2169 = vmul.f32 %v2166, 1.442695
    %v2170 = vpow.pop %v2169
    %v2171 = vadd.f32 %v2168, 1.0
    %v2172 = vadd.f32 %v2170, 1.0
    %v2173 = vrcp.pop %v2171
    %v2174 = vmul.f32 %v2171, %v2173
    %v2175 = vsub.f32 1.0, %v2174
    %v2176 = vmul.f32 %v2173, %v2175
    %v2177 = vadd.f32 %v2173, %v2176
    %vm2178 = vweird.f32 %v2171
    %vm2179 = vweird.f32 %v2173
    %vm2180 = vmor %vm2178, %vm2179
    %v2181 = vsel %vm2180, %v2173, %v2177
    %v2182 = vand.u32 2147483647, %v2171
    %vm2183 = vcmp.eq.f32.partialorder %v2182, 8.507059e+37
    %v2184 = vand.u32 %v2171, 2147483648
    %v2185 = vor.u32 1.1754944e-38, %v2184
    %v2186 = vsel %vm2183, %v2185, %v2181
    %v2187 = vmul.f32 1.0, %v2186
    %v2188 = vrcp.pop %v2172
    %v2189 = vmul.f32 %v2172, %v2188
    %v2190 = vsub.f32 1.0, %v2189
    %v2191 = vmul.f32 %v2188, %v2190
    %v2192 = vadd.f32 %v2188, %v2191
    %vm2193 = vweird.f32 %v2172
    %vm2194 = vweird.f32 %v2188
    %vm2195 = vmor %vm2193, %vm2194
    %v2196 = vsel %vm2195, %v2188, %v2192
    %v2197 = vand.u32 2147483647, %v2172
    %vm2198 = vcmp.eq.f32.partialorder %v2197, 8.507059e+37
    %v2199 = vand.u32 %v2172, 2147483648
    %v2200 = vor.u32 1.1754944e-38, %v2199
    %v2201 = vsel %vm2198, %v2200, %v2196
    %v2202 = vmul.f32 1.0, %v2201
    %2203 = vst [vmem:[#allocation17] sm:$0xff] %v2187
    %2204 = vst [vmem:[#allocation17 + $0x8] sm:$0xff] %v2202
    // Predicated region
    $region86: #{tpu_custom_call.1} parent=1 // pred_check
      _
    $region87: #{tpu_custom_call.1} parent=1 // pred_check_branch
      %2206 = sbr.rel (0) target = $region89
    $region88: #{tpu_custom_call.1} parent=1 // pred_region
      %2208 = vsyncadd [#allocation4], 0
      %s2210 = sshll.u32 [#allocation17], 4
      %s2211 = int_to_ptr.vmem [resolvable:$true] %s2210
      %s2212 = sshll.u32 %s12, 4
      %s2213 = int_to_ptr.hbm [resolvable:$true] %s2212
      %2215 = dma.vmem_to_hbm [thread:$0]  %s2211, 256, %s2213, [#allocation4]
    $region89: #{tpu_custom_call.1} parent=1 // pred_fallthru
      _
    // Predicated region
    $region90: #{tpu_custom_call.1} parent=1 // pred_check
      _
    $region91: #{tpu_custom_call.1} parent=1 // pred_check_branch
      %2217 = sbr.rel (0) target = $region93
    $region92: #{tpu_custom_call.1} parent=1 // pred_region
      %2219 = vsyncadd [#allocation19], 0
      %s2221 = sshll.u32 [#allocation18], 4
      %s2222 = int_to_ptr.vmem [resolvable:$true] %s2221
      %s2223 = sshll.u32 %s13, 4
      %s2224 = int_to_ptr.hbm [resolvable:$true] %s2223
      %2226 = dma.vmem_to_hbm [thread:$0]  %s2222, 128, %s2224, [#allocation19]
    $region93: #{tpu_custom_call.1} parent=1 // pred_fallthru
      _
    // Predicated region
    $region94: #{tpu_custom_call.1} parent=1 // pred_check
      _
    $region95: #{tpu_custom_call.1} parent=1 // pred_check_branch
      %2228 = sbr.rel (0) target = $region97
    $region96: #{tpu_custom_call.1} parent=1 // pred_region
      %2230 = dma.done [#allocation4], 256
    $region97: #{tpu_custom_call.1} parent=1 // pred_fallthru
      _
    // Predicated region
    $region98: #{tpu_custom_call.1} parent=1 // pred_check
      _
    $region99: #{tpu_custom_call.1} parent=1 // pred_check_branch
      %2232 = sbr.rel (0) target = $region101
    $region100: #{tpu_custom_call.1} parent=1 // pred_region
      %2234 = dma.done [#allocation19], 128
    $region101: #{tpu_custom_call.1} parent=1 // pred_fallthru
      _
    %2235 = vsyncpa [#allocation3], 1
    %2236 = vsyncpa [#allocation6], 1
    %2237 = vsyncpa [#allocation9], 1
    %2238 = vsyncpa [#allocation12], 1
    %2239 = vsyncpa [#allocation15], 1
    %2240 = vsyncpa [#allocation4], 1
    %2241 = vsyncpa [#allocation19], 1

</llo_original>
